<compile_context>
chip_gen: v7x
topology: tpu7x:2x2x1
jax: 0.10.0
libtpu: 0.0.40
codegen_flags: <defaults>
</compile_context>

<pallas_src>
import functools
import math

import jax
import jax.numpy as jnp
from jax.experimental import pallas as pl
from jax.experimental.pallas import tpu as pltpu

BN_EPS = 1e-5
_TM_MAX = 2048                      # per review: 1024-2048 row tiles


def _fused_kernel(x_ref, w_ref, fold_ref, gamma_ref, beta_ref, o_ref,
                  sum_ref, sumsq_ref, scale_ref, shift_ref, stash_ref,
                  *, tm, m_d, inv_m, use_stash, ragged):
    p = pl.program_id(0)            # pass: 0 = stats, 1 = normalize
    i = pl.program_id(1)            # row tile
    lanes_out = o_ref.shape[-1]

    def compute_y():
        x = jnp.maximum(x_ref[...], 0.0)                                   # VPU
        return jnp.dot(x, w_ref[...], preferred_element_type=jnp.float32)  # MXU

    # ------------------ pass 0: stream tiles, accumulate BN stats -------------
    @pl.when(jnp.logical_and(p == 0, i == 0))
    def _init():
        sum_ref[...] = jnp.zeros_like(sum_ref)
        sumsq_ref[...] = jnp.zeros_like(sumsq_ref)

    @pl.when(p == 0)
    def _stats():
        y = compute_y()
        if ragged:
            # Mask garbage rows of the partial last tile out of the statistics.
            valid = m_d - i * tm
            rows = jax.lax.broadcasted_iota(jnp.int32, (tm, 1), 0)
            y = jnp.where(rows < valid, y, 0.0)
        if use_stash:
            stash_ref[i] = y        # keep y resident; pass 1 skips the x re-read
        if tm % 8 == 0:
            # (8, lanes_out) partials: pure VALU adds, sublane collapse deferred
            # to the one-shot finalize (keeps the XLU off the hot loop).
            yg = y.reshape(tm // 8, 8, lanes_out)
            sum_ref[...] = sum_ref[...] + jnp.sum(yg, axis=0)
            sumsq_ref[...] = sumsq_ref[...] + jnp.sum(yg * yg, axis=0)
        else:                       # tiny single-tile case (tm == m_d < 8)
            sum_ref[0:1, :] = sum_ref[0:1, :] + jnp.sum(y, axis=0, keepdims=True)
            sumsq_ref[0:1, :] = sumsq_ref[0:1, :] + jnp.sum(y * y, axis=0,
                                                            keepdims=True)

    # ---------- in-kernel finalize: fold lane-replicas -> scale / shift --------
    @pl.when(jnp.logical_and(p == 1, i == 0))
    def _finalize():
        # fold_ref = tile(eye(c_out), (r, r)): sums the r replicas of each
        # channel and re-broadcasts the result across all replica lanes, so no
        # cross-lane reshape is ever needed in-kernel.
        folded_s = jnp.dot(sum_ref[...], fold_ref[...],
                           preferred_element_type=jnp.float32)
        folded_q = jnp.dot(sumsq_ref[...], fold_ref[...],
                           preferred_element_type=jnp.float32)
        s1 = jnp.sum(folded_s, axis=0, keepdims=True)
        s2 = jnp.sum(folded_q, axis=0, keepdims=True)
        mean = s1 * inv_m
        var = jnp.maximum(s2 * inv_m - mean * mean, 0.0)
        inv_std = jax.lax.rsqrt(var + BN_EPS)
        scale = gamma_ref[...] * inv_std
        scale_ref[...] = scale
        shift_ref[...] = beta_ref[...] - mean * scale

    # ----------------- pass 1: normalize, write lane-dense output --------------
    @pl.when(p == 1)
    def _normalize():
        if use_stash:
            y = stash_ref[i]
        else:
            y = compute_y()
        o_ref[...] = y * scale_ref[...] + shift_ref[...]


def _vmem_capacity_bytes():
    try:
        cap = getattr(pltpu.get_tpu_info(), "vmem_capacity_bytes", None)
        if cap:
            return int(cap)
    except Exception:
        pass
    return 64 * 1024 * 1024         # conservative (v7x-sized) fallback


@functools.partial(jax.jit, static_argnames=("c_out",))
def factorized_reduce(x_nchw, w0, w1, gamma, beta, *, c_out):
    """x_nchw: (N, C_in, H, W) float32. Returns (N, C_out, ceil(H/2), ceil(W/2))."""
    n, c_in, h, w = x_nchw.shape
    h_out = (h + 1) // 2
    w_out = (w + 1) // 2
    m = n * h_out * w_out
    c_cat = 2 * c_in
    c0 = w0.shape[0]

    # ---- glue: layout + stride-2 sampling (one fused XLA gather, no full pad) ----
    x_nhwc = jnp.transpose(x_nchw, (0, 2, 3, 1))
    x0 = x_nhwc[:, 0::2, 0::2, :]                       # conv0 grid
    if (h % 2) or (w % 2):
        xp = jnp.pad(x_nhwc, ((0, 0), (0, h % 2), (0, w % 2), (0, 0)))
        x1 = xp[:, 1::2, 1::2, :]                       # conv1 grid (odd edge)
    else:
        x1 = x_nhwc[:, 1::2, 1::2, :]                   # pad not needed
    x_cat = jnp.concatenate([x0.reshape(m, c_in), x1.reshape(m, c_in)], axis=-1)

    # Block-diagonal fused weight: [x0 @ W0, x1 @ W1] == x_cat @ W_bd.
    w0_mat = jnp.transpose(w0[:, :, 0, 0], (1, 0))      # (C_in, C0)
    w1_mat = jnp.transpose(w1[:, :, 0, 0], (1, 0))      # (C_in, C1)
    w_bd = jnp.zeros((c_cat, c_out), jnp.float32)
    w_bd = w_bd.at[:c_in, :c0].set(w0_mat)
    w_bd = w_bd.at[c_in:, c0:].set(w1_mat)

    # ---- lane densification keyed on the OUTPUT width (review item 1/2) ----
    r = 128 // math.gcd(c_out, 128)         # smallest r with r*c_out % 128 == 0
    while r > 1 and r * max(c_cat, c_out) > 1024:   # pathological-channel guard
        r = (r + 1) // 2
    lanes_in = r * c_cat
    lanes_out = r * c_out
    m_pad = -(-m // r) * r                  # pad rows only up to a multiple of r
    m_d = m_pad // r
    if m_pad != m:
        x_cat = jnp.pad(x_cat, ((0, m_pad - m), (0, 0)))
    x_d = x_cat.reshape(m_d, lanes_in)
    w_dense = jnp.kron(jnp.eye(r, dtype=jnp.float32), w_bd)      # (L_in, L_out)

    # Replica-fold matrix and lane-replicated affine params.
    fold = jnp.tile(jnp.eye(c_out, dtype=jnp.float32), (r, r))   # (L_out, L_out)
    gamma_d = jnp.tile(gamma.reshape(-1).astype(jnp.float32), r).reshape(1, lanes_out)
    beta_d = jnp.tile(beta.reshape(-1).astype(jnp.float32), r).reshape(1, lanes_out)

    # ---- generation-aware tile sizing / VMEM budgeting (review items 3/4) ----
    phys = _vmem_capacity_bytes()
    if phys <= 96 * 1024 * 1024:            # v7x-class (64 MiB physical VMEM)
        budget = 28 * 1024 * 1024
    else:                                   # v5e / v6e (128 MiB physical VMEM)
        budget = 64 * 1024 * 1024
    vmem_limit = int(max(32 * 1024 * 1024,
                         min(phys - 16 * 1024 * 1024, 100 * 1024 * 1024)))

    fixed_bytes = 4 * (lanes_in * lanes_out + lanes_out * lanes_out
                       + 2 * 8 * lanes_out + 4 * lanes_out)
    row_bytes = 4 * (3 * lanes_in + 4 * lanes_out)   # dbl-buffered I/O + temps
    tm = (max(budget - fixed_bytes, 8 * row_bytes) // row_bytes) // 8 * 8
    tm = int(max(8, min(_TM_MAX, tm)))
    if m_d <= tm:
        tm = m_d
        n_tiles = 1
    else:
        n_tiles = -(-m_d // tm)
    ragged = (n_tiles * tm) != m_d

    # Stash the densified y in VMEM when it fits -> x is streamed exactly once.
    stash_bytes = n_tiles * tm * lanes_out * 4
    use_stash = (n_tiles > 1
                 and fixed_bytes + tm * row_bytes + stash_bytes <= budget)
    stash_shape = (n_tiles, tm, lanes_out) if use_stash else (1, 8, lanes_out)

    if use_stash:
        x_map = lambda pa, ti: (ti * (1 - pa), 0)    # no x re-stream in pass 1
    else:
        x_map = lambda pa, ti: (ti, 0)
    resident = lambda pa, ti: (0, 0)

    kernel = functools.partial(
        _fused_kernel, tm=tm, m_d=m_d, inv_m=1.0 / float(m),
        use_stash=use_stash, ragged=ragged)

    out_d = pl.pallas_call(
        kernel,
        out_shape=jax.ShapeDtypeStruct((m_d, lanes_out), jnp.float32),
        grid=(2, n_tiles),
        in_specs=[pl.BlockSpec((tm, lanes_in), x_map),
                  pl.BlockSpec((lanes_in, lanes_out), resident),
                  pl.BlockSpec((lanes_out, lanes_out), resident),
                  pl.BlockSpec((1, lanes_out), resident),
                  pl.BlockSpec((1, lanes_out), resident)],
        # (p*i, 0): block 0 during the stats pass (never written back), block i
        # during the normalize pass -> every output block hits HBM exactly once.
        out_specs=pl.BlockSpec((tm, lanes_out), lambda pa, ti: (pa * ti, 0)),
        scratch_shapes=[pltpu.VMEM((8, lanes_out), jnp.float32),   # sum partials
                        pltpu.VMEM((8, lanes_out), jnp.float32),   # sumsq partials
                        pltpu.VMEM((1, lanes_out), jnp.float32),   # scale
                        pltpu.VMEM((1, lanes_out), jnp.float32),   # shift
                        pltpu.VMEM(stash_shape, jnp.float32)],     # y stash
        compiler_params=pltpu.CompilerParams(
            dimension_semantics=("arbitrary", "arbitrary"),
            vmem_limit_bytes=vmem_limit),
    )(x_d, w_dense, fold, gamma_d, beta_d)

    # ---- undo densification / back to NCHW (required by the module spec) ----
    out = out_d.reshape(m_pad, c_out)[:m].reshape(n, h_out, w_out, c_out)
    return jnp.transpose(out, (0, 3, 1, 2))


def _reference(x_nchw, w0, w1, gamma, beta, c_out):
    """Pure-JAX reference mirroring the PyTorch forward (training-mode BN)."""
    x = jnp.maximum(x_nchw, 0.0)
    y = jnp.pad(x, ((0, 0), (0, 0), (0, 1), (0, 1)))
    y_shift = y[:, :, 1:, 1:]

    def conv1x1_s2(inp, wgt):
        return jax.lax.conv_general_dilated(
            inp, wgt, window_strides=(2, 2), padding="VALID",
            dimension_numbers=("NCHW", "OIHW", "NCHW"))

    out = jnp.concatenate([conv1x1_s2(x, w0), conv1x1_s2(y_shift, w1)], axis=1)
    mean = jnp.mean(out, axis=(0, 2, 3), keepdims=True)
    var = jnp.mean((out - mean) ** 2, axis=(0, 2, 3), keepdims=True)
    g = gamma.reshape(1, c_out, 1, 1)
    b = beta.reshape(1, c_out, 1, 1)
    return (out - mean) * jax.lax.rsqrt(var + BN_EPS) * g + b


if __name__ == "__main__":
    # Small shapes consistent with the module: N=2, C_in=4, C_out=8, H=W=16.
    N, C_IN, C_OUT, H, W = 2, 4, 8, 16, 16
    C0 = C_OUT // 2
    C1 = C_OUT - C_OUT // 2

    key = jax.random.PRNGKey(0)
    kx, kw0, kw1 = jax.random.split(key, 3)
    x = jax.random.normal(kx, (N, C_IN, H, W), dtype=jnp.float32)
    # Conv2d weights, PyTorch layout (C_out_i, C_in, 1, 1); deterministic init.
    w0 = 0.1 * jax.random.normal(kw0, (C0, C_IN, 1, 1), dtype=jnp.float32)
    w1 = 0.1 * jax.random.normal(kw1, (C1, C_IN, 1, 1), dtype=jnp.float32)
    # BatchNorm affine params (PyTorch init: gamma=1, beta=0).
    gamma = jnp.ones((C_OUT,), dtype=jnp.float32)
    beta = jnp.zeros((C_OUT,), dtype=jnp.float32)

    out = factorized_reduce(x, w0, w1, gamma, beta, c_out=C_OUT)
    out = jax.block_until_ready(out)

    ref = _reference(x, w0, w1, gamma, beta, C_OUT)
    assert out.shape == (N, C_OUT, H // 2, W // 2), out.shape
    assert jnp.allclose(out, ref, atol=1e-4, rtol=1e-4), float(
        jnp.max(jnp.abs(out - ref)))

    print("KERNEL_OK")
</pallas_src>

<mosaic_0001>
module attributes {stable_mosaic.version = 11 : i64} {
  func.func @_fused_kernel(%arg0: i32, %arg1: i32, %arg2: memref<8x128xf32, #tpu.memory_space<vmem>>, %arg3: memref<128x128xf32, #tpu.memory_space<vmem>>, %arg4: memref<128x128xf32, #tpu.memory_space<vmem>>, %arg5: memref<1x128xf32, #tpu.memory_space<vmem>>, %arg6: memref<1x128xf32, #tpu.memory_space<vmem>>, %arg7: memref<8x128xf32, #tpu.memory_space<vmem>>, %arg8: memref<8x128xf32, #tpu.memory_space<vmem>>, %arg9: memref<8x128xf32, #tpu.memory_space<vmem>>, %arg10: memref<1x128xf32, #tpu.memory_space<vmem>>, %arg11: memref<1x128xf32, #tpu.memory_space<vmem>>, %arg12: memref<1x8x128xf32, #tpu.memory_space<vmem>>) attributes {dimension_semantics = [#tpu.dimension_semantics<arbitrary>, #tpu.dimension_semantics<arbitrary>], iteration_bounds = array<i64: 2, 1>, scalar_prefetch = 0 : i64, scratch_operands = 5 : i64, tpu.core_type = #tpu.core_type<tc>, window_params = [{transform_indices = @transform_0, window_bounds = array<i64: 8, 128>}, {pipeline_mode = #tpu.pipeline_mode<synchronous>, transform_indices = @transform_1, window_bounds = array<i64: 128, 128>}, {pipeline_mode = #tpu.pipeline_mode<synchronous>, transform_indices = @transform_2, window_bounds = array<i64: 128, 128>}, {pipeline_mode = #tpu.pipeline_mode<synchronous>, transform_indices = @transform_3, window_bounds = array<i64: 1, 128>}, {pipeline_mode = #tpu.pipeline_mode<synchronous>, transform_indices = @transform_4, window_bounds = array<i64: 1, 128>}, {transform_indices = @transform_5, window_bounds = array<i64: 8, 128>}]} {
    %c0_i32 = arith.constant 0 : i32
    %0 = arith.cmpi eq, %arg0, %c0_i32 : i32
    %c0_i32_0 = arith.constant 0 : i32
    %1 = arith.cmpi eq, %arg1, %c0_i32_0 : i32
    %2 = arith.andi %0, %1 : i1
    %3 = arith.extui %2 : i1 to i32
    %c0_i32_1 = arith.constant 0 : i32
    %4 = arith.cmpi ne, %3, %c0_i32_1 : i32
    scf.if %4 {
      %cst = arith.constant 0.000000e+00 : f32
      %16 = vector.broadcast %cst : f32 to vector<8x128xf32>
      %c0 = arith.constant 0 : index
      %c0_8 = arith.constant 0 : index
      %17 = vector.load %arg8[%c0, %c0_8] : memref<8x128xf32, #tpu.memory_space<vmem>>, vector<8x128xf32>
      tpu.vector_store %arg8[%c0, %c0_8], %16 {strides = array<i32>} : memref<8x128xf32, #tpu.memory_space<vmem>>, vector<8x128xf32>,
      %cst_9 = arith.constant 0.000000e+00 : f32
      %18 = vector.broadcast %cst_9 : f32 to vector<8x128xf32>
      %c0_10 = arith.constant 0 : index
      %c0_11 = arith.constant 0 : index
      %19 = vector.load %arg9[%c0_10, %c0_11] : memref<8x128xf32, #tpu.memory_space<vmem>>, vector<8x128xf32>
      tpu.vector_store %arg9[%c0_10, %c0_11], %18 {strides = array<i32>} : memref<8x128xf32, #tpu.memory_space<vmem>>, vector<8x128xf32>,
    } else {
    }
    %c0_i32_2 = arith.constant 0 : i32
    %5 = arith.cmpi eq, %arg0, %c0_i32_2 : i32
    %6 = arith.extui %5 : i1 to i32
    %c0_i32_3 = arith.constant 0 : i32
    %7 = arith.cmpi ne, %6, %c0_i32_3 : i32
    scf.if %7 {
      %c0 = arith.constant 0 : index
      %c0_8 = arith.constant 0 : index
      %16 = vector.load %arg2[%c0, %c0_8] : memref<8x128xf32, #tpu.memory_space<vmem>>, vector<8x128xf32>
      %cst = arith.constant 0.000000e+00 : f32
      %17 = vector.broadcast %cst : f32 to vector<8x128xf32>
      %18 = arith.maximumf %16, %17 : vector<8x128xf32>
      %c0_9 = arith.constant 0 : index
      %c0_10 = arith.constant 0 : index
      %19 = vector.load %arg3[%c0_9, %c0_10] : memref<128x128xf32, #tpu.memory_space<vmem>>, vector<128x128xf32>
      %cst_11 = arith.constant dense<0.000000e+00> : vector<8x128xf32>
      %20 = tpu.matmul %18, %19, %cst_11 {dimension_numbers = #tpu.dot_dimension_numbers<[1], [0], [0], [1], [0, 0, 1, 1], [], []>} : vector<8x128xf32>, vector<128x128xf32>, vector<8x128xf32> -> vector<8x128xf32>
      %21 = vector.shape_cast %20 : vector<8x128xf32> to vector<1x8x128xf32>
      %c0_12 = arith.constant 0 : index
      %c0_13 = arith.constant 0 : index
      %22 = vector.load %arg8[%c0_12, %c0_13] : memref<8x128xf32, #tpu.memory_space<vmem>>, vector<8x128xf32>
      %cst_14 = arith.constant dense<0.000000e+00> : vector<8x128xf32>
      %23 = vector.multi_reduction <add>, %21, %cst_14 [0] : vector<1x8x128xf32> to vector<8x128xf32>
      %24 = arith.addf %22, %23 : vector<8x128xf32>
      %c0_15 = arith.constant 0 : index
      %c0_16 = arith.constant 0 : index
      %25 = vector.load %arg8[%c0_15, %c0_16] : memref<8x128xf32, #tpu.memory_space<vmem>>, vector<8x128xf32>
      tpu.vector_store %arg8[%c0_15, %c0_16], %24 {strides = array<i32>} : memref<8x128xf32, #tpu.memory_space<vmem>>, vector<8x128xf32>,
      %c0_17 = arith.constant 0 : index
      %c0_18 = arith.constant 0 : index
      %26 = vector.load %arg9[%c0_17, %c0_18] : memref<8x128xf32, #tpu.memory_space<vmem>>, vector<8x128xf32>
      %27 = arith.mulf %21, %21 : vector<1x8x128xf32>
      %cst_19 = arith.constant dense<0.000000e+00> : vector<8x128xf32>
      %28 = vector.multi_reduction <add>, %27, %cst_19 [0] : vector<1x8x128xf32> to vector<8x128xf32>
      %29 = arith.addf %26, %28 : vector<8x128xf32>
      %c0_20 = arith.constant 0 : index
      %c0_21 = arith.constant 0 : index
      %30 = vector.load %arg9[%c0_20, %c0_21] : memref<8x128xf32, #tpu.memory_space<vmem>>, vector<8x128xf32>
      tpu.vector_store %arg9[%c0_20, %c0_21], %29 {strides = array<i32>} : memref<8x128xf32, #tpu.memory_space<vmem>>, vector<8x128xf32>,
    } else {
    }
    %c1_i32 = arith.constant 1 : i32
    %8 = arith.cmpi eq, %arg0, %c1_i32 : i32
    %c0_i32_4 = arith.constant 0 : i32
    %9 = arith.cmpi eq, %arg1, %c0_i32_4 : i32
    %10 = arith.andi %8, %9 : i1
    %11 = arith.extui %10 : i1 to i32
    %c0_i32_5 = arith.constant 0 : i32
    %12 = arith.cmpi ne, %11, %c0_i32_5 : i32
    scf.if %12 {
      %c0 = arith.constant 0 : index
      %c0_8 = arith.constant 0 : index
      %16 = vector.load %arg8[%c0, %c0_8] : memref<8x128xf32, #tpu.memory_space<vmem>>, vector<8x128xf32>
      %c0_9 = arith.constant 0 : index
      %c0_10 = arith.constant 0 : index
      %17 = vector.load %arg4[%c0_9, %c0_10] : memref<128x128xf32, #tpu.memory_space<vmem>>, vector<128x128xf32>
      %cst = arith.constant dense<0.000000e+00> : vector<8x128xf32>
      %18 = tpu.matmul %16, %17, %cst {dimension_numbers = #tpu.dot_dimension_numbers<[1], [0], [0], [1], [0, 0, 1, 1], [], []>} : vector<8x128xf32>, vector<128x128xf32>, vector<8x128xf32> -> vector<8x128xf32>
      %c0_11 = arith.constant 0 : index
      %c0_12 = arith.constant 0 : index
      %19 = vector.load %arg9[%c0_11, %c0_12] : memref<8x128xf32, #tpu.memory_space<vmem>>, vector<8x128xf32>
      %c0_13 = arith.constant 0 : index
      %c0_14 = arith.constant 0 : index
      %20 = vector.load %arg4[%c0_13, %c0_14] : memref<128x128xf32, #tpu.memory_space<vmem>>, vector<128x128xf32>
      %cst_15 = arith.constant dense<0.000000e+00> : vector<8x128xf32>
      %21 = tpu.matmul %19, %20, %cst_15 {dimension_numbers = #tpu.dot_dimension_numbers<[1], [0], [0], [1], [0, 0, 1, 1], [], []>} : vector<8x128xf32>, vector<128x128xf32>, vector<8x128xf32> -> vector<8x128xf32>
      %cst_16 = arith.constant dense<0.000000e+00> : vector<128xf32>
      %22 = vector.multi_reduction <add>, %18, %cst_16 [0] : vector<8x128xf32> to vector<128xf32>
      %23 = vector.shape_cast %22 : vector<128xf32> to vector<1x128xf32>
      %cst_17 = arith.constant dense<0.000000e+00> : vector<128xf32>
      %24 = vector.multi_reduction <add>, %21, %cst_17 [0] : vector<8x128xf32> to vector<128xf32>
      %25 = vector.shape_cast %24 : vector<128xf32> to vector<1x128xf32>
      %cst_18 = arith.constant 7.812500e-03 : f32
      %26 = vector.broadcast %cst_18 : f32 to vector<1x128xf32>
      %27 = arith.mulf %23, %26 : vector<1x128xf32>
      %cst_19 = arith.constant 7.812500e-03 : f32
      %28 = vector.broadcast %cst_19 : f32 to vector<1x128xf32>
      %29 = arith.mulf %25, %28 : vector<1x128xf32>
      %30 = arith.mulf %27, %27 : vector<1x128xf32>
      %31 = arith.subf %29, %30 : vector<1x128xf32>
      %cst_20 = arith.constant 0.000000e+00 : f32
      %32 = vector.broadcast %cst_20 : f32 to vector<1x128xf32>
      %33 = arith.maximumf %31, %32 : vector<1x128xf32>
      %cst_21 = arith.constant 9.99999974E-6 : f32
      %34 = vector.broadcast %cst_21 : f32 to vector<1x128xf32>
      %35 = arith.addf %33, %34 : vector<1x128xf32>
      %36 = math.rsqrt %35 : vector<1x128xf32>
      %c0_22 = arith.constant 0 : index
      %c0_23 = arith.constant 0 : index
      %37 = vector.load %arg5[%c0_22, %c0_23] : memref<1x128xf32, #tpu.memory_space<vmem>>, vector<1x128xf32>
      %38 = arith.mulf %37, %36 : vector<1x128xf32>
      %c0_24 = arith.constant 0 : index
      %c0_25 = arith.constant 0 : index
      %39 = vector.load %arg10[%c0_24, %c0_25] : memref<1x128xf32, #tpu.memory_space<vmem>>, vector<1x128xf32>
      tpu.vector_store %arg10[%c0_24, %c0_25], %38 {strides = array<i32>} : memref<1x128xf32, #tpu.memory_space<vmem>>, vector<1x128xf32>,
      %c0_26 = arith.constant 0 : index
      %c0_27 = arith.constant 0 : index
      %40 = vector.load %arg6[%c0_26, %c0_27] : memref<1x128xf32, #tpu.memory_space<vmem>>, vector<1x128xf32>
      %41 = arith.mulf %27, %38 : vector<1x128xf32>
      %42 = arith.subf %40, %41 : vector<1x128xf32>
      %c0_28 = arith.constant 0 : index
      %c0_29 = arith.constant 0 : index
      %43 = vector.load %arg11[%c0_28, %c0_29] : memref<1x128xf32, #tpu.memory_space<vmem>>, vector<1x128xf32>
      tpu.vector_store %arg11[%c0_28, %c0_29], %42 {strides = array<i32>} : memref<1x128xf32, #tpu.memory_space<vmem>>, vector<1x128xf32>,
    } else {
    }
    %c1_i32_6 = arith.constant 1 : i32
    %13 = arith.cmpi eq, %arg0, %c1_i32_6 : i32
    %14 = arith.extui %13 : i1 to i32
    %c0_i32_7 = arith.constant 0 : i32
    %15 = arith.cmpi ne, %14, %c0_i32_7 : i32
    scf.if %15 {
      %c0 = arith.constant 0 : index
      %c0_8 = arith.constant 0 : index
      %16 = vector.load %arg2[%c0, %c0_8] : memref<8x128xf32, #tpu.memory_space<vmem>>, vector<8x128xf32>
      %cst = arith.constant 0.000000e+00 : f32
      %17 = vector.broadcast %cst : f32 to vector<8x128xf32>
      %18 = arith.maximumf %16, %17 : vector<8x128xf32>
      %c0_9 = arith.constant 0 : index
      %c0_10 = arith.constant 0 : index
      %19 = vector.load %arg3[%c0_9, %c0_10] : memref<128x128xf32, #tpu.memory_space<vmem>>, vector<128x128xf32>
      %cst_11 = arith.constant dense<0.000000e+00> : vector<8x128xf32>
      %20 = tpu.matmul %18, %19, %cst_11 {dimension_numbers = #tpu.dot_dimension_numbers<[1], [0], [0], [1], [0, 0, 1, 1], [], []>} : vector<8x128xf32>, vector<128x128xf32>, vector<8x128xf32> -> vector<8x128xf32>
      %c0_12 = arith.constant 0 : index
      %c0_13 = arith.constant 0 : index
      %21 = vector.load %arg10[%c0_12, %c0_13] : memref<1x128xf32, #tpu.memory_space<vmem>>, vector<1x128xf32>
      %22 = vector.broadcast %21 : vector<1x128xf32> to vector<8x128xf32>
      %23 = arith.mulf %20, %22 : vector<8x128xf32>
      %c0_14 = arith.constant 0 : index
      %c0_15 = arith.constant 0 : index
      %24 = vector.load %arg11[%c0_14, %c0_15] : memref<1x128xf32, #tpu.memory_space<vmem>>, vector<1x128xf32>
      %25 = vector.broadcast %24 : vector<1x128xf32> to vector<8x128xf32>
      %26 = arith.addf %23, %25 : vector<8x128xf32>
      %c0_16 = arith.constant 0 : index
      %c0_17 = arith.constant 0 : index
      %27 = vector.load %arg7[%c0_16, %c0_17] : memref<8x128xf32, #tpu.memory_space<vmem>>, vector<8x128xf32>
      tpu.vector_store %arg7[%c0_16, %c0_17], %26 {strides = array<i32>} : memref<8x128xf32, #tpu.memory_space<vmem>>, vector<8x128xf32>,
    } else {
    }
    return
  }
  func.func @transform_0(%arg0: i32, %arg1: i32) -> (i32, i32) {
    %c0_i32 = arith.constant 0 : i32
    %c0_i32_0 = arith.constant 0 : i32
    return %arg1, %c0_i32 : i32, i32
  }
  func.func @transform_1(%arg0: i32, %arg1: i32) -> (i32, i32) {
    %c0_i32 = arith.constant 0 : i32
    %c0_i32_0 = arith.constant 0 : i32
    %c0_i32_1 = arith.constant 0 : i32
    return %c0_i32, %c0_i32_0 : i32, i32
  }
  func.func @transform_2(%arg0: i32, %arg1: i32) -> (i32, i32) {
    %c0_i32 = arith.constant 0 : i32
    %c0_i32_0 = arith.constant 0 : i32
    %c0_i32_1 = arith.constant 0 : i32
    return %c0_i32, %c0_i32_0 : i32, i32
  }
  func.func @transform_3(%arg0: i32, %arg1: i32) -> (i32, i32) {
    %c0_i32 = arith.constant 0 : i32
    %c0_i32_0 = arith.constant 0 : i32
    %c0_i32_1 = arith.constant 0 : i32
    return %c0_i32, %c0_i32_0 : i32, i32
  }
  func.func @transform_4(%arg0: i32, %arg1: i32) -> (i32, i32) {
    %c0_i32 = arith.constant 0 : i32
    %c0_i32_0 = arith.constant 0 : i32
    %c0_i32_1 = arith.constant 0 : i32
    return %c0_i32, %c0_i32_0 : i32, i32
  }
  func.func @transform_5(%arg0: i32, %arg1: i32) -> (i32, i32) {
    %0 = arith.muli %arg0, %arg1 : i32
    %c0_i32 = arith.constant 0 : i32
    %c0_i32_0 = arith.constant 0 : i32
    return %0, %c0_i32 : i32, i32
  }
}

</mosaic_0001>

<llo_original>
// kernel: tile.18
$region0: #{tile.18}
  #allocation0 [shape = 's32[1]{0}', space=sflag, size = 0x4, scoped, tag = 'scoped memory for tile.18']
  %s0 = inlined_call_operand.vmem [shape: f32[8,8], index: 0, kind: input, shape index: {}]
  %s1 = inlined_call_operand.vmem [shape: f32[16,8,16,8], index: 1, kind: output, shape index: {}]
  // Predicated region
  $region2: #{tile.18} parent=0 // pred_check
    _
  $region3: #{tile.18} parent=0 // pred_check_branch
    %3 = sbr.rel (0) target = $region5
  $region4: #{tile.18} parent=0 // pred_region
    _
  $region5: #{tile.18} parent=0 // pred_fallthru
    _
  %v4 = vld [vmem:[%s0] ss:$0 sm:$0xff]
  %5 = vst [vmem:[%s1] sm:$0xff] %v4
  %s6 = scalar_lea.vmem %s1, 128
  %7 = vst [vmem:[%s6] sm:$0xff] %v4
  %s8 = scalar_lea.vmem %s1, 256
  %9 = vst [vmem:[%s8] sm:$0xff] %v4
  %s10 = scalar_lea.vmem %s1, 384
  %11 = vst [vmem:[%s10] sm:$0xff] %v4
  %s12 = scalar_lea.vmem %s1, 512
  %13 = vst [vmem:[%s12] sm:$0xff] %v4
  %s14 = scalar_lea.vmem %s1, 640
  %15 = vst [vmem:[%s14] sm:$0xff] %v4
  %s16 = scalar_lea.vmem %s1, 768
  %17 = vst [vmem:[%s16] sm:$0xff] %v4
  %s18 = scalar_lea.vmem %s1, 896
  %19 = vst [vmem:[%s18] sm:$0xff] %v4
  %s20 = scalar_lea.vmem %s1, 1024
  %21 = vst [vmem:[%s20] sm:$0xff] %v4
  %s22 = scalar_lea.vmem %s1, 1152
  %23 = vst [vmem:[%s22] sm:$0xff] %v4
  %s24 = scalar_lea.vmem %s1, 1280
  %25 = vst [vmem:[%s24] sm:$0xff] %v4
  %s26 = scalar_lea.vmem %s1, 1408
  %27 = vst [vmem:[%s26] sm:$0xff] %v4
  %s28 = scalar_lea.vmem %s1, 1536
  %29 = vst [vmem:[%s28] sm:$0xff] %v4
  %s30 = scalar_lea.vmem %s1, 1664
  %31 = vst [vmem:[%s30] sm:$0xff] %v4
  %s32 = scalar_lea.vmem %s1, 1792
  %33 = vst [vmem:[%s32] sm:$0xff] %v4
  %s34 = scalar_lea.vmem %s1, 1920
  %35 = vst [vmem:[%s34] sm:$0xff] %v4
  %s36 = scalar_lea.vmem %s0, 1
  %v37 = vld [vmem:[%s36] ss:$0 sm:$0xff]
  %s38 = scalar_lea.vmem %s1, 16
  %39 = vst [vmem:[%s38] sm:$0xff] %v37
  %s40 = scalar_lea.vmem %s1, 144
  %41 = vst [vmem:[%s40] sm:$0xff] %v37
  %s42 = scalar_lea.vmem %s1, 272
  %43 = vst [vmem:[%s42] sm:$0xff] %v37
  %s44 = scalar_lea.vmem %s1, 400
  %45 = vst [vmem:[%s44] sm:$0xff] %v37
  %s46 = scalar_lea.vmem %s1, 528
  %47 = vst [vmem:[%s46] sm:$0xff] %v37
  %s48 = scalar_lea.vmem %s1, 656
  %49 = vst [vmem:[%s48] sm:$0xff] %v37
  %s50 = scalar_lea.vmem %s1, 784
  %51 = vst [vmem:[%s50] sm:$0xff] %v37
  %s52 = scalar_lea.vmem %s1, 912
  %53 = vst [vmem:[%s52] sm:$0xff] %v37
  %s54 = scalar_lea.vmem %s1, 1040
  %55 = vst [vmem:[%s54] sm:$0xff] %v37
  %s56 = scalar_lea.vmem %s1, 1168
  %57 = vst [vmem:[%s56] sm:$0xff] %v37
  %s58 = scalar_lea.vmem %s1, 1296
  %59 = vst [vmem:[%s58] sm:$0xff] %v37
  %s60 = scalar_lea.vmem %s1, 1424
  %61 = vst [vmem:[%s60] sm:$0xff] %v37
  %s62 = scalar_lea.vmem %s1, 1552
  %63 = vst [vmem:[%s62] sm:$0xff] %v37
  %s64 = scalar_lea.vmem %s1, 1680
  %65 = vst [vmem:[%s64] sm:$0xff] %v37
  %s66 = scalar_lea.vmem %s1, 1808
  %67 = vst [vmem:[%s66] sm:$0xff] %v37
  %s68 = scalar_lea.vmem %s1, 1936
  %69 = vst [vmem:[%s68] sm:$0xff] %v37
  %s70 = scalar_lea.vmem %s0, 2
  %v71 = vld [vmem:[%s70] ss:$0 sm:$0xff]
  %s72 = scalar_lea.vmem %s1, 32
  %73 = vst [vmem:[%s72] sm:$0xff] %v71
  %s74 = scalar_lea.vmem %s1, 160
  %75 = vst [vmem:[%s74] sm:$0xff] %v71
  %s76 = scalar_lea.vmem %s1, 288
  %77 = vst [vmem:[%s76] sm:$0xff] %v71
  %s78 = scalar_lea.vmem %s1, 416
  %79 = vst [vmem:[%s78] sm:$0xff] %v71
  %s80 = scalar_lea.vmem %s1, 544
  %81 = vst [vmem:[%s80] sm:$0xff] %v71
  %s82 = scalar_lea.vmem %s1, 672
  %83 = vst [vmem:[%s82] sm:$0xff] %v71
  %s84 = scalar_lea.vmem %s1, 800
  %85 = vst [vmem:[%s84] sm:$0xff] %v71
  %s86 = scalar_lea.vmem %s1, 928
  %87 = vst [vmem:[%s86] sm:$0xff] %v71
  %s88 = scalar_lea.vmem %s1, 1056
  %89 = vst [vmem:[%s88] sm:$0xff] %v71
  %s90 = scalar_lea.vmem %s1, 1184
  %91 = vst [vmem:[%s90] sm:$0xff] %v71
  %s92 = scalar_lea.vmem %s1, 1312
  %93 = vst [vmem:[%s92] sm:$0xff] %v71
  %s94 = scalar_lea.vmem %s1, 1440
  %95 = vst [vmem:[%s94] sm:$0xff] %v71
  %s96 = scalar_lea.vmem %s1, 1568
  %97 = vst [vmem:[%s96] sm:$0xff] %v71
  %s98 = scalar_lea.vmem %s1, 1696
  %99 = vst [vmem:[%s98] sm:$0xff] %v71
  %s100 = scalar_lea.vmem %s1, 1824
  %101 = vst [vmem:[%s100] sm:$0xff] %v71
  %s102 = scalar_lea.vmem %s1, 1952
  %103 = vst [vmem:[%s102] sm:$0xff] %v71
  %s104 = scalar_lea.vmem %s0, 3
  %v105 = vld [vmem:[%s104] ss:$0 sm:$0xff]
  %s106 = scalar_lea.vmem %s1, 48
  %107 = vst [vmem:[%s106] sm:$0xff] %v105
  %s108 = scalar_lea.vmem %s1, 176
  %109 = vst [vmem:[%s108] sm:$0xff] %v105
  %s110 = scalar_lea.vmem %s1, 304
  %111 = vst [vmem:[%s110] sm:$0xff] %v105
  %s112 = scalar_lea.vmem %s1, 432
  %113 = vst [vmem:[%s112] sm:$0xff] %v105
  %s114 = scalar_lea.vmem %s1, 560
  %115 = vst [vmem:[%s114] sm:$0xff] %v105
  %s116 = scalar_lea.vmem %s1, 688
  %117 = vst [vmem:[%s116] sm:$0xff] %v105
  %s118 = scalar_lea.vmem %s1, 816
  %119 = vst [vmem:[%s118] sm:$0xff] %v105
  %s120 = scalar_lea.vmem %s1, 944
  %121 = vst [vmem:[%s120] sm:$0xff] %v105
  %s122 = scalar_lea.vmem %s1, 1072
  %123 = vst [vmem:[%s122] sm:$0xff] %v105
  %s124 = scalar_lea.vmem %s1, 1200
  %125 = vst [vmem:[%s124] sm:$0xff] %v105
  %s126 = scalar_lea.vmem %s1, 1328
  %127 = vst [vmem:[%s126] sm:$0xff] %v105
  %s128 = scalar_lea.vmem %s1, 1456
  %129 = vst [vmem:[%s128] sm:$0xff] %v105
  %s130 = scalar_lea.vmem %s1, 1584
  %131 = vst [vmem:[%s130] sm:$0xff] %v105
  %s132 = scalar_lea.vmem %s1, 1712
  %133 = vst [vmem:[%s132] sm:$0xff] %v105
  %s134 = scalar_lea.vmem %s1, 1840
  %135 = vst [vmem:[%s134] sm:$0xff] %v105
  %s136 = scalar_lea.vmem %s1, 1968
  %137 = vst [vmem:[%s136] sm:$0xff] %v105
  %s138 = scalar_lea.vmem %s0, 4
  %v139 = vld [vmem:[%s138] ss:$0 sm:$0xff]
  %s140 = scalar_lea.vmem %s1, 64
  %141 = vst [vmem:[%s140] sm:$0xff] %v139
  %s142 = scalar_lea.vmem %s1, 192
  %143 = vst [vmem:[%s142] sm:$0xff] %v139
  %s144 = scalar_lea.vmem %s1, 320
  %145 = vst [vmem:[%s144] sm:$0xff] %v139
  %s146 = scalar_lea.vmem %s1, 448
  %147 = vst [vmem:[%s146] sm:$0xff] %v139
  %s148 = scalar_lea.vmem %s1, 576
  %149 = vst [vmem:[%s148] sm:$0xff] %v139
  %s150 = scalar_lea.vmem %s1, 704
  %151 = vst [vmem:[%s150] sm:$0xff] %v139
  %s152 = scalar_lea.vmem %s1, 832
  %153 = vst [vmem:[%s152] sm:$0xff] %v139
  %s154 = scalar_lea.vmem %s1, 960
  %155 = vst [vmem:[%s154] sm:$0xff] %v139
  %s156 = scalar_lea.vmem %s1, 1088
  %157 = vst [vmem:[%s156] sm:$0xff] %v139
  %s158 = scalar_lea.vmem %s1, 1216
  %159 = vst [vmem:[%s158] sm:$0xff] %v139
  %s160 = scalar_lea.vmem %s1, 1344
  %161 = vst [vmem:[%s160] sm:$0xff] %v139
  %s162 = scalar_lea.vmem %s1, 1472
  %163 = vst [vmem:[%s162] sm:$0xff] %v139
  %s164 = scalar_lea.vmem %s1, 1600
  %165 = vst [vmem:[%s164] sm:$0xff] %v139
  %s166 = scalar_lea.vmem %s1, 1728
  %167 = vst [vmem:[%s166] sm:$0xff] %v139
  %s168 = scalar_lea.vmem %s1, 1856
  %169 = vst [vmem:[%s168] sm:$0xff] %v139
  %s170 = scalar_lea.vmem %s1, 1984
  %171 = vst [vmem:[%s170] sm:$0xff] %v139
  %s172 = scalar_lea.vmem %s0, 5
  %v173 = vld [vmem:[%s172] ss:$0 sm:$0xff]
  %s174 = scalar_lea.vmem %s1, 80
  %175 = vst [vmem:[%s174] sm:$0xff] %v173
  %s176 = scalar_lea.vmem %s1, 208
  %177 = vst [vmem:[%s176] sm:$0xff] %v173
  %s178 = scalar_lea.vmem %s1, 336
  %179 = vst [vmem:[%s178] sm:$0xff] %v173
  %s180 = scalar_lea.vmem %s1, 464
  %181 = vst [vmem:[%s180] sm:$0xff] %v173
  %s182 = scalar_lea.vmem %s1, 592
  %183 = vst [vmem:[%s182] sm:$0xff] %v173
  %s184 = scalar_lea.vmem %s1, 720
  %185 = vst [vmem:[%s184] sm:$0xff] %v173
  %s186 = scalar_lea.vmem %s1, 848
  %187 = vst [vmem:[%s186] sm:$0xff] %v173
  %s188 = scalar_lea.vmem %s1, 976
  %189 = vst [vmem:[%s188] sm:$0xff] %v173
  %s190 = scalar_lea.vmem %s1, 1104
  %191 = vst [vmem:[%s190] sm:$0xff] %v173
  %s192 = scalar_lea.vmem %s1, 1232
  %193 = vst [vmem:[%s192] sm:$0xff] %v173
  %s194 = scalar_lea.vmem %s1, 1360
  %195 = vst [vmem:[%s194] sm:$0xff] %v173
  %s196 = scalar_lea.vmem %s1, 1488
  %197 = vst [vmem:[%s196] sm:$0xff] %v173
  %s198 = scalar_lea.vmem %s1, 1616
  %199 = vst [vmem:[%s198] sm:$0xff] %v173
  %s200 = scalar_lea.vmem %s1, 1744
  %201 = vst [vmem:[%s200] sm:$0xff] %v173
  %s202 = scalar_lea.vmem %s1, 1872
  %203 = vst [vmem:[%s202] sm:$0xff] %v173
  %s204 = scalar_lea.vmem %s1, 2000
  %205 = vst [vmem:[%s204] sm:$0xff] %v173
  %s206 = scalar_lea.vmem %s0, 6
  %v207 = vld [vmem:[%s206] ss:$0 sm:$0xff]
  %s208 = scalar_lea.vmem %s1, 96
  %209 = vst [vmem:[%s208] sm:$0xff] %v207
  %s210 = scalar_lea.vmem %s1, 224
  %211 = vst [vmem:[%s210] sm:$0xff] %v207
  %s212 = scalar_lea.vmem %s1, 352
  %213 = vst [vmem:[%s212] sm:$0xff] %v207
  %s214 = scalar_lea.vmem %s1, 480
  %215 = vst [vmem:[%s214] sm:$0xff] %v207
  %s216 = scalar_lea.vmem %s1, 608
  %217 = vst [vmem:[%s216] sm:$0xff] %v207
  %s218 = scalar_lea.vmem %s1, 736
  %219 = vst [vmem:[%s218] sm:$0xff] %v207
  %s220 = scalar_lea.vmem %s1, 864
  %221 = vst [vmem:[%s220] sm:$0xff] %v207
  %s222 = scalar_lea.vmem %s1, 992
  %223 = vst [vmem:[%s222] sm:$0xff] %v207
  %s224 = scalar_lea.vmem %s1, 1120
  %225 = vst [vmem:[%s224] sm:$0xff] %v207
  %s226 = scalar_lea.vmem %s1, 1248
  %227 = vst [vmem:[%s226] sm:$0xff] %v207
  %s228 = scalar_lea.vmem %s1, 1376
  %229 = vst [vmem:[%s228] sm:$0xff] %v207
  %s230 = scalar_lea.vmem %s1, 1504
  %231 = vst [vmem:[%s230] sm:$0xff] %v207
  %s232 = scalar_lea.vmem %s1, 1632
  %233 = vst [vmem:[%s232] sm:$0xff] %v207
  %s234 = scalar_lea.vmem %s1, 1760
  %235 = vst [vmem:[%s234] sm:$0xff] %v207
  %s236 = scalar_lea.vmem %s1, 1888
  %237 = vst [vmem:[%s236] sm:$0xff] %v207
  %s238 = scalar_lea.vmem %s1, 2016
  %239 = vst [vmem:[%s238] sm:$0xff] %v207
  %s240 = scalar_lea.vmem %s0, 7
  %v241 = vld [vmem:[%s240] ss:$0 sm:$0xff]
  %s242 = scalar_lea.vmem %s1, 112
  %243 = vst [vmem:[%s242] sm:$0xff] %v241
  %s244 = scalar_lea.vmem %s1, 240
  %245 = vst [vmem:[%s244] sm:$0xff] %v241
  %s246 = scalar_lea.vmem %s1, 368
  %247 = vst [vmem:[%s246] sm:$0xff] %v241
  %s248 = scalar_lea.vmem %s1, 496
  %249 = vst [vmem:[%s248] sm:$0xff] %v241
  %s250 = scalar_lea.vmem %s1, 624
  %251 = vst [vmem:[%s250] sm:$0xff] %v241
  %s252 = scalar_lea.vmem %s1, 752
  %253 = vst [vmem:[%s252] sm:$0xff] %v241
  %s254 = scalar_lea.vmem %s1, 880
  %255 = vst [vmem:[%s254] sm:$0xff] %v241
  %s256 = scalar_lea.vmem %s1, 1008
  %257 = vst [vmem:[%s256] sm:$0xff] %v241
  %s258 = scalar_lea.vmem %s1, 1136
  %259 = vst [vmem:[%s258] sm:$0xff] %v241
  %s260 = scalar_lea.vmem %s1, 1264
  %261 = vst [vmem:[%s260] sm:$0xff] %v241
  %s262 = scalar_lea.vmem %s1, 1392
  %263 = vst [vmem:[%s262] sm:$0xff] %v241
  %s264 = scalar_lea.vmem %s1, 1520
  %265 = vst [vmem:[%s264] sm:$0xff] %v241
  %s266 = scalar_lea.vmem %s1, 1648
  %267 = vst [vmem:[%s266] sm:$0xff] %v241
  %s268 = scalar_lea.vmem %s1, 1776
  %269 = vst [vmem:[%s268] sm:$0xff] %v241
  %s270 = scalar_lea.vmem %s1, 1904
  %271 = vst [vmem:[%s270] sm:$0xff] %v241
  %s272 = scalar_lea.vmem %s1, 2032
  %273 = vst [vmem:[%s272] sm:$0xff] %v241
  %s274 = scalar_lea.vmem %s1, 8
  %275 = vst [vmem:[%s274] sm:$0xff] %v4
  %s276 = scalar_lea.vmem %s1, 136
  %277 = vst [vmem:[%s276] sm:$0xff] %v4
  %s278 = scalar_lea.vmem %s1, 264
  %279 = vst [vmem:[%s278] sm:$0xff] %v4
  %s280 = scalar_lea.vmem %s1, 392
  %281 = vst [vmem:[%s280] sm:$0xff] %v4
  %s282 = scalar_lea.vmem %s1, 520
  %283 = vst [vmem:[%s282] sm:$0xff] %v4
  %s284 = scalar_lea.vmem %s1, 648
  %285 = vst [vmem:[%s284] sm:$0xff] %v4
  %s286 = scalar_lea.vmem %s1, 776
  %287 = vst [vmem:[%s286] sm:$0xff] %v4
  %s288 = scalar_lea.vmem %s1, 904
  %289 = vst [vmem:[%s288] sm:$0xff] %v4
  %s290 = scalar_lea.vmem %s1, 1032
  %291 = vst [vmem:[%s290] sm:$0xff] %v4
  %s292 = scalar_lea.vmem %s1, 1160
  %293 = vst [vmem:[%s292] sm:$0xff] %v4
  %s294 = scalar_lea.vmem %s1, 1288
  %295 = vst [vmem:[%s294] sm:$0xff] %v4
  %s296 = scalar_lea.vmem %s1, 1416
  %297 = vst [vmem:[%s296] sm:$0xff] %v4
  %s298 = scalar_lea.vmem %s1, 1544
  %299 = vst [vmem:[%s298] sm:$0xff] %v4
  %s300 = scalar_lea.vmem %s1, 1672
  %301 = vst [vmem:[%s300] sm:$0xff] %v4
  %s302 = scalar_lea.vmem %s1, 1800
  %303 = vst [vmem:[%s302] sm:$0xff] %v4
  %s304 = scalar_lea.vmem %s1, 1928
  %305 = vst [vmem:[%s304] sm:$0xff] %v4
  %s306 = scalar_lea.vmem %s1, 24
  %307 = vst [vmem:[%s306] sm:$0xff] %v37
  %s308 = scalar_lea.vmem %s1, 152
  %309 = vst [vmem:[%s308] sm:$0xff] %v37
  %s310 = scalar_lea.vmem %s1, 280
  %311 = vst [vmem:[%s310] sm:$0xff] %v37
  %s312 = scalar_lea.vmem %s1, 408
  %313 = vst [vmem:[%s312] sm:$0xff] %v37
  %s314 = scalar_lea.vmem %s1, 536
  %315 = vst [vmem:[%s314] sm:$0xff] %v37
  %s316 = scalar_lea.vmem %s1, 664
  %317 = vst [vmem:[%s316] sm:$0xff] %v37
  %s318 = scalar_lea.vmem %s1, 792
  %319 = vst [vmem:[%s318] sm:$0xff] %v37
  %s320 = scalar_lea.vmem %s1, 920
  %321 = vst [vmem:[%s320] sm:$0xff] %v37
  %s322 = scalar_lea.vmem %s1, 1048
  %323 = vst [vmem:[%s322] sm:$0xff] %v37
  %s324 = scalar_lea.vmem %s1, 1176
  %325 = vst [vmem:[%s324] sm:$0xff] %v37
  %s326 = scalar_lea.vmem %s1, 1304
  %327 = vst [vmem:[%s326] sm:$0xff] %v37
  %s328 = scalar_lea.vmem %s1, 1432
  %329 = vst [vmem:[%s328] sm:$0xff] %v37
  %s330 = scalar_lea.vmem %s1, 1560
  %331 = vst [vmem:[%s330] sm:$0xff] %v37
  %s332 = scalar_lea.vmem %s1, 1688
  %333 = vst [vmem:[%s332] sm:$0xff] %v37
  %s334 = scalar_lea.vmem %s1, 1816
  %335 = vst [vmem:[%s334] sm:$0xff] %v37
  %s336 = scalar_lea.vmem %s1, 1944
  %337 = vst [vmem:[%s336] sm:$0xff] %v37
  %s338 = scalar_lea.vmem %s1, 40
  %339 = vst [vmem:[%s338] sm:$0xff] %v71
  %s340 = scalar_lea.vmem %s1, 168
  %341 = vst [vmem:[%s340] sm:$0xff] %v71
  %s342 = scalar_lea.vmem %s1, 296
  %343 = vst [vmem:[%s342] sm:$0xff] %v71
  %s344 = scalar_lea.vmem %s1, 424
  %345 = vst [vmem:[%s344] sm:$0xff] %v71
  %s346 = scalar_lea.vmem %s1, 552
  %347 = vst [vmem:[%s346] sm:$0xff] %v71
  %s348 = scalar_lea.vmem %s1, 680
  %349 = vst [vmem:[%s348] sm:$0xff] %v71
  %s350 = scalar_lea.vmem %s1, 808
  %351 = vst [vmem:[%s350] sm:$0xff] %v71
  %s352 = scalar_lea.vmem %s1, 936
  %353 = vst [vmem:[%s352] sm:$0xff] %v71
  %s354 = scalar_lea.vmem %s1, 1064
  %355 = vst [vmem:[%s354] sm:$0xff] %v71
  %s356 = scalar_lea.vmem %s1, 1192
  %357 = vst [vmem:[%s356] sm:$0xff] %v71
  %s358 = scalar_lea.vmem %s1, 1320
  %359 = vst [vmem:[%s358] sm:$0xff] %v71
  %s360 = scalar_lea.vmem %s1, 1448
  %361 = vst [vmem:[%s360] sm:$0xff] %v71
  %s362 = scalar_lea.vmem %s1, 1576
  %363 = vst [vmem:[%s362] sm:$0xff] %v71
  %s364 = scalar_lea.vmem %s1, 1704
  %365 = vst [vmem:[%s364] sm:$0xff] %v71
  %s366 = scalar_lea.vmem %s1, 1832
  %367 = vst [vmem:[%s366] sm:$0xff] %v71
  %s368 = scalar_lea.vmem %s1, 1960
  %369 = vst [vmem:[%s368] sm:$0xff] %v71
  %s370 = scalar_lea.vmem %s1, 56
  %371 = vst [vmem:[%s370] sm:$0xff] %v105
  %s372 = scalar_lea.vmem %s1, 184
  %373 = vst [vmem:[%s372] sm:$0xff] %v105
  %s374 = scalar_lea.vmem %s1, 312
  %375 = vst [vmem:[%s374] sm:$0xff] %v105
  %s376 = scalar_lea.vmem %s1, 440
  %377 = vst [vmem:[%s376] sm:$0xff] %v105
  %s378 = scalar_lea.vmem %s1, 568
  %379 = vst [vmem:[%s378] sm:$0xff] %v105
  %s380 = scalar_lea.vmem %s1, 696
  %381 = vst [vmem:[%s380] sm:$0xff] %v105
  %s382 = scalar_lea.vmem %s1, 824
  %383 = vst [vmem:[%s382] sm:$0xff] %v105
  %s384 = scalar_lea.vmem %s1, 952
  %385 = vst [vmem:[%s384] sm:$0xff] %v105
  %s386 = scalar_lea.vmem %s1, 1080
  %387 = vst [vmem:[%s386] sm:$0xff] %v105
  %s388 = scalar_lea.vmem %s1, 1208
  %389 = vst [vmem:[%s388] sm:$0xff] %v105
  %s390 = scalar_lea.vmem %s1, 1336
  %391 = vst [vmem:[%s390] sm:$0xff] %v105
  %s392 = scalar_lea.vmem %s1, 1464
  %393 = vst [vmem:[%s392] sm:$0xff] %v105
  %s394 = scalar_lea.vmem %s1, 1592
  %395 = vst [vmem:[%s394] sm:$0xff] %v105
  %s396 = scalar_lea.vmem %s1, 1720
  %397 = vst [vmem:[%s396] sm:$0xff] %v105
  %s398 = scalar_lea.vmem %s1, 1848
  %399 = vst [vmem:[%s398] sm:$0xff] %v105
  %s400 = scalar_lea.vmem %s1, 1976
  %401 = vst [vmem:[%s400] sm:$0xff] %v105
  %s402 = scalar_lea.vmem %s1, 72
  %403 = vst [vmem:[%s402] sm:$0xff] %v139
  %s404 = scalar_lea.vmem %s1, 200
  %405 = vst [vmem:[%s404] sm:$0xff] %v139
  %s406 = scalar_lea.vmem %s1, 328
  %407 = vst [vmem:[%s406] sm:$0xff] %v139
  %s408 = scalar_lea.vmem %s1, 456
  %409 = vst [vmem:[%s408] sm:$0xff] %v139
  %s410 = scalar_lea.vmem %s1, 584
  %411 = vst [vmem:[%s410] sm:$0xff] %v139
  %s412 = scalar_lea.vmem %s1, 712
  %413 = vst [vmem:[%s412] sm:$0xff] %v139
  %s414 = scalar_lea.vmem %s1, 840
  %415 = vst [vmem:[%s414] sm:$0xff] %v139
  %s416 = scalar_lea.vmem %s1, 968
  %417 = vst [vmem:[%s416] sm:$0xff] %v139
  %s418 = scalar_lea.vmem %s1, 1096
  %419 = vst [vmem:[%s418] sm:$0xff] %v139
  %s420 = scalar_lea.vmem %s1, 1224
  %421 = vst [vmem:[%s420] sm:$0xff] %v139
  %s422 = scalar_lea.vmem %s1, 1352
  %423 = vst [vmem:[%s422] sm:$0xff] %v139
  %s424 = scalar_lea.vmem %s1, 1480
  %425 = vst [vmem:[%s424] sm:$0xff] %v139
  %s426 = scalar_lea.vmem %s1, 1608
  %427 = vst [vmem:[%s426] sm:$0xff] %v139
  %s428 = scalar_lea.vmem %s1, 1736
  %429 = vst [vmem:[%s428] sm:$0xff] %v139
  %s430 = scalar_lea.vmem %s1, 1864
  %431 = vst [vmem:[%s430] sm:$0xff] %v139
  %s432 = scalar_lea.vmem %s1, 1992
  %433 = vst [vmem:[%s432] sm:$0xff] %v139
  %s434 = scalar_lea.vmem %s1, 88
  %435 = vst [vmem:[%s434] sm:$0xff] %v173
  %s436 = scalar_lea.vmem %s1, 216
  %437 = vst [vmem:[%s436] sm:$0xff] %v173
  %s438 = scalar_lea.vmem %s1, 344
  %439 = vst [vmem:[%s438] sm:$0xff] %v173
  %s440 = scalar_lea.vmem %s1, 472
  %441 = vst [vmem:[%s440] sm:$0xff] %v173
  %s442 = scalar_lea.vmem %s1, 600
  %443 = vst [vmem:[%s442] sm:$0xff] %v173
  %s444 = scalar_lea.vmem %s1, 728
  %445 = vst [vmem:[%s444] sm:$0xff] %v173
  %s446 = scalar_lea.vmem %s1, 856
  %447 = vst [vmem:[%s446] sm:$0xff] %v173
  %s448 = scalar_lea.vmem %s1, 984
  %449 = vst [vmem:[%s448] sm:$0xff] %v173
  %s450 = scalar_lea.vmem %s1, 1112
  %451 = vst [vmem:[%s450] sm:$0xff] %v173
  %s452 = scalar_lea.vmem %s1, 1240
  %453 = vst [vmem:[%s452] sm:$0xff] %v173
  %s454 = scalar_lea.vmem %s1, 1368
  %455 = vst [vmem:[%s454] sm:$0xff] %v173
  %s456 = scalar_lea.vmem %s1, 1496
  %457 = vst [vmem:[%s456] sm:$0xff] %v173
  %s458 = scalar_lea.vmem %s1, 1624
  %459 = vst [vmem:[%s458] sm:$0xff] %v173
  %s460 = scalar_lea.vmem %s1, 1752
  %461 = vst [vmem:[%s460] sm:$0xff] %v173
  %s462 = scalar_lea.vmem %s1, 1880
  %463 = vst [vmem:[%s462] sm:$0xff] %v173
  %s464 = scalar_lea.vmem %s1, 2008
  %465 = vst [vmem:[%s464] sm:$0xff] %v173
  %s466 = scalar_lea.vmem %s1, 104
  %467 = vst [vmem:[%s466] sm:$0xff] %v207
  %s468 = scalar_lea.vmem %s1, 232
  %469 = vst [vmem:[%s468] sm:$0xff] %v207
  %s470 = scalar_lea.vmem %s1, 360
  %471 = vst [vmem:[%s470] sm:$0xff] %v207
  %s472 = scalar_lea.vmem %s1, 488
  %473 = vst [vmem:[%s472] sm:$0xff] %v207
  %s474 = scalar_lea.vmem %s1, 616
  %475 = vst [vmem:[%s474] sm:$0xff] %v207
  %s476 = scalar_lea.vmem %s1, 744
  %477 = vst [vmem:[%s476] sm:$0xff] %v207
  %s478 = scalar_lea.vmem %s1, 872
  %479 = vst [vmem:[%s478] sm:$0xff] %v207
  %s480 = scalar_lea.vmem %s1, 1000
  %481 = vst [vmem:[%s480] sm:$0xff] %v207
  %s482 = scalar_lea.vmem %s1, 1128
  %483 = vst [vmem:[%s482] sm:$0xff] %v207
  %s484 = scalar_lea.vmem %s1, 1256
  %485 = vst [vmem:[%s484] sm:$0xff] %v207
  %s486 = scalar_lea.vmem %s1, 1384
  %487 = vst [vmem:[%s486] sm:$0xff] %v207
  %s488 = scalar_lea.vmem %s1, 1512
  %489 = vst [vmem:[%s488] sm:$0xff] %v207
  %s490 = scalar_lea.vmem %s1, 1640
  %491 = vst [vmem:[%s490] sm:$0xff] %v207
  %s492 = scalar_lea.vmem %s1, 1768
  %493 = vst [vmem:[%s492] sm:$0xff] %v207
  %s494 = scalar_lea.vmem %s1, 1896
  %495 = vst [vmem:[%s494] sm:$0xff] %v207
  %s496 = scalar_lea.vmem %s1, 2024
  %497 = vst [vmem:[%s496] sm:$0xff] %v207
  %s498 = scalar_lea.vmem %s1, 120
  %499 = vst [vmem:[%s498] sm:$0xff] %v241
  %s500 = scalar_lea.vmem %s1, 248
  %501 = vst [vmem:[%s500] sm:$0xff] %v241
  %s502 = scalar_lea.vmem %s1, 376
  %503 = vst [vmem:[%s502] sm:$0xff] %v241
  %s504 = scalar_lea.vmem %s1, 504
  %505 = vst [vmem:[%s504] sm:$0xff] %v241
  %s506 = scalar_lea.vmem %s1, 632
  %507 = vst [vmem:[%s506] sm:$0xff] %v241
  %s508 = scalar_lea.vmem %s1, 760
  %509 = vst [vmem:[%s508] sm:$0xff] %v241
  %s510 = scalar_lea.vmem %s1, 888
  %511 = vst [vmem:[%s510] sm:$0xff] %v241
  %s512 = scalar_lea.vmem %s1, 1016
  %513 = vst [vmem:[%s512] sm:$0xff] %v241
  %s514 = scalar_lea.vmem %s1, 1144
  %515 = vst [vmem:[%s514] sm:$0xff] %v241
  %s516 = scalar_lea.vmem %s1, 1272
  %517 = vst [vmem:[%s516] sm:$0xff] %v241
  %s518 = scalar_lea.vmem %s1, 1400
  %519 = vst [vmem:[%s518] sm:$0xff] %v241
  %s520 = scalar_lea.vmem %s1, 1528
  %521 = vst [vmem:[%s520] sm:$0xff] %v241
  %s522 = scalar_lea.vmem %s1, 1656
  %523 = vst [vmem:[%s522] sm:$0xff] %v241
  %s524 = scalar_lea.vmem %s1, 1784
  %525 = vst [vmem:[%s524] sm:$0xff] %v241
  %s526 = scalar_lea.vmem %s1, 1912
  %527 = vst [vmem:[%s526] sm:$0xff] %v241
  %s528 = scalar_lea.vmem %s1, 2040
  %529 = vst [vmem:[%s528] sm:$0xff] %v241

// kernel: tile.23
$region0: #{tile.23}
  #allocation0 [shape = 's32[1]{0}', space=sflag, size = 0x4, scoped, tag = 'scoped memory for tile.23']
  %s0 = inlined_call_operand.vmem [shape: f32[8], index: 0, kind: input, shape index: {}]
  %s1 = inlined_call_operand.vmem [shape: f32[16,8], index: 1, kind: output, shape index: {}]
  // Predicated region
  $region2: #{tile.23} parent=0 // pred_check
    _
  $region3: #{tile.23} parent=0 // pred_check_branch
    %3 = sbr.rel (0) target = $region5
  $region4: #{tile.23} parent=0 // pred_region
    _
  $region5: #{tile.23} parent=0 // pred_fallthru
    _
  %v4 = vld [vmem:[%s0] ss:$0 sm:$0xff]
  %5 = vst [vmem:[%s1] sm:$0xff] %v4
  %s6 = scalar_lea.vmem %s1, 8
  %7 = vst [vmem:[%s6] sm:$0xff] %v4

// kernel: tile.24
$region0: #{tile.24}
  %s0 = inlined_call_operand.vmem [shape: f32[16,8], index: 0, kind: input, shape index: {}]
  %s1 = inlined_call_operand.vmem [shape: f32[1,128], index: 1, kind: output, shape index: {}]
  $region1: #{tile.24} parent=0
    #allocation0 [shape = 'u8[4096]{0}', space=vmem, size = 0x1000, scoped, tag = 'scoped mem for output reshape']
    %v2 = vld [vmem:[%s0] sm:$0x1]
    %vm3 = vcmask 64512
    %4 = vst.msk [vmem:[#allocation0] sm:$0x1] %vm3, %v2
    %s5 = scalar_lea.vmem %s0, 15
    %v6 = vld [vmem:[%s5] sm:$0x1]
    %7 = vrot.lane.b32.xlu0 %v6, 120
    %v8 = vpop.permute.xlu0 %7
    %vm9 = vcmask 1048512
    %10 = vst.msk [vmem:[#allocation0] sm:$0x1] %vm9, %v8
    %s11 = scalar_lea.vmem %s0, 14
    %v12 = vld [vmem:[%s11] sm:$0x1]
    %13 = vrot.lane.b32.xlu0 %v12, 112
    %v14 = vpop.permute.xlu0 %13
    %vm15 = vcmask 982912
    %16 = vst.msk [vmem:[#allocation0] sm:$0x1] %vm15, %v14
    %s17 = scalar_lea.vmem %s0, 13
    %v18 = vld [vmem:[%s17] sm:$0x1]
    %19 = vrot.lane.b32.xlu0 %v18, 104
    %v20 = vpop.permute.xlu0 %19
    %vm21 = vcmask 917312
    %22 = vst.msk [vmem:[#allocation0] sm:$0x1] %vm21, %v20
    %s23 = scalar_lea.vmem %s0, 12
    %v24 = vld [vmem:[%s23] sm:$0x1]
    %25 = vrot.lane.b32.xlu0 %v24, 96
    %v26 = vpop.permute.xlu0 %25
    %vm27 = vcmask 851712
    %28 = vst.msk [vmem:[#allocation0] sm:$0x1] %vm27, %v26
    %s29 = scalar_lea.vmem %s0, 11
    %v30 = vld [vmem:[%s29] sm:$0x1]
    %31 = vrot.lane.b32.xlu0 %v30, 88
    %v32 = vpop.permute.xlu0 %31
    %vm33 = vcmask 786112
    %34 = vst.msk [vmem:[#allocation0] sm:$0x1] %vm33, %v32
    %s35 = scalar_lea.vmem %s0, 10
    %v36 = vld [vmem:[%s35] sm:$0x1]
    %37 = vrot.lane.b32.xlu0 %v36, 80
    %v38 = vpop.permute.xlu0 %37
    %vm39 = vcmask 720512
    %40 = vst.msk [vmem:[#allocation0] sm:$0x1] %vm39, %v38
    %s41 = scalar_lea.vmem %s0, 9
    %v42 = vld [vmem:[%s41] sm:$0x1]
    %43 = vrot.lane.b32.xlu0 %v42, 72
    %v44 = vpop.permute.xlu0 %43
    %vm45 = vcmask 654912
    %46 = vst.msk [vmem:[#allocation0] sm:$0x1] %vm45, %v44
    %s47 = scalar_lea.vmem %s0, 8
    %v48 = vld [vmem:[%s47] sm:$0x1]
    %49 = vrot.lane.b32.xlu0 %v48, 64
    %v50 = vpop.permute.xlu0 %49
    %vm51 = vcmask 589312
    %52 = vst.msk [vmem:[#allocation0] sm:$0x1] %vm51, %v50
    %s53 = scalar_lea.vmem %s0, 7
    %v54 = vld [vmem:[%s53] sm:$0x1]
    %55 = vrot.lane.b32.xlu0 %v54, 56
    %v56 = vpop.permute.xlu0 %55
    %vm57 = vcmask 523712
    %58 = vst.msk [vmem:[#allocation0] sm:$0x1] %vm57, %v56
    %s59 = scalar_lea.vmem %s0, 6
    %v60 = vld [vmem:[%s59] sm:$0x1]
    %61 = vrot.lane.b32.xlu0 %v60, 48
    %v62 = vpop.permute.xlu0 %61
    %vm63 = vcmask 458112
    %64 = vst.msk [vmem:[#allocation0] sm:$0x1] %vm63, %v62
    %s65 = scalar_lea.vmem %s0, 5
    %v66 = vld [vmem:[%s65] sm:$0x1]
    %67 = vrot.lane.b32.xlu0 %v66, 40
    %v68 = vpop.permute.xlu0 %67
    %vm69 = vcmask 392512
    %70 = vst.msk [vmem:[#allocation0] sm:$0x1] %vm69, %v68
    %s71 = scalar_lea.vmem %s0, 4
    %v72 = vld [vmem:[%s71] sm:$0x1]
    %73 = vrot.lane.b32.xlu0 %v72, 32
    %v74 = vpop.permute.xlu0 %73
    %vm75 = vcmask 326912
    %76 = vst.msk [vmem:[#allocation0] sm:$0x1] %vm75, %v74
    %s77 = scalar_lea.vmem %s0, 3
    %v78 = vld [vmem:[%s77] sm:$0x1]
    %79 = vrot.lane.b32.xlu0 %v78, 24
    %v80 = vpop.permute.xlu0 %79
    %vm81 = vcmask 261312
    %82 = vst.msk [vmem:[#allocation0] sm:$0x1] %vm81, %v80
    %s83 = scalar_lea.vmem %s0, 2
    %v84 = vld [vmem:[%s83] sm:$0x1]
    %85 = vrot.lane.b32.xlu0 %v84, 16
    %v86 = vpop.permute.xlu0 %85
    %vm87 = vcmask 195712
    %88 = vst.msk [vmem:[#allocation0] sm:$0x1] %vm87, %v86
    %s89 = scalar_lea.vmem %s0, 1
    %v90 = vld [vmem:[%s89] sm:$0x1]
    %91 = vrot.lane.b32.xlu0 %v90, 8
    %v92 = vpop.permute.xlu0 %91
    %vm93 = vcmask 130112
    %94 = vst.msk [vmem:[#allocation0] sm:$0x1] %vm93, %v92
    %s96 = sshllo.u32 0, 1
    %v98 = vld [vmem:[#allocation0] sm:%s96]
    %s99 = sshllo.u32 0, 1
    %100 = vst [vmem:[%s1] sm:%s99] %v98

// kernel: factorized_reduce.1
$region0: #{factorized_reduce.1}
  #allocation0 [shape = 'u32[]', space=smem, size = 0x4, offset = 0x4, fixed_abs, tag = 'smem constant byte address 0x4 - core index']
  #allocation1 [shape = 'u32[144,128]{1,0:T(1,128)}', space=vmem, size = 0x12000, scoped, tag = 'internal scratch']
  #allocation2 [shape = 'f32[8,128]{1,0:T(8,128)}', space=vmem, size = 0x1000, scoped, tag = 'scratch operand']
  #allocation3 [shape = 'f32[8,128]{1,0:T(8,128)}', space=vmem, size = 0x1000, scoped, tag = 'scratch operand']
  #allocation4 [shape = 'f32[1,128]{1,0:T(1,128)}', space=vmem, size = 0x200, scoped, tag = 'scratch operand']
  #allocation5 [shape = 'f32[1,128]{1,0:T(1,128)}', space=vmem, size = 0x200, scoped, tag = 'scratch operand']
  #allocation6 [shape = 'f32[1,8,128]{2,1,0:T(8,128)}', space=vmem, size = 0x1000, scoped, tag = 'scratch operand']
  %s0 = inlined_call_operand.vmem [shape: f32[8,128], index: 0, kind: input, shape index: {}]
  %s1 = inlined_call_operand.vmem [shape: f32[128,128], index: 1, kind: input, shape index: {}]
  %s2 = inlined_call_operand.vmem [shape: f32[128,128], index: 2, kind: input, shape index: {}]
  %s3 = inlined_call_operand.vmem [shape: f32[1,128], index: 3, kind: input, shape index: {}]
  %s4 = inlined_call_operand.vmem [shape: f32[1,128], index: 4, kind: input, shape index: {}]
  %s5 = inlined_call_operand.vmem [shape: f32[8,128], index: 5, kind: output, shape index: {}]
  %s6 = sld [smem:[#allocation0]]
  $region69: #{factorized_reduce.1} parent=0
    _
  %s8 = ssub.s32 1, %s6
  %s9 = scalar_select 0, %s8, %s6
  loop: start=0, step=1, limit=4
  $region2: #{factorized_reduce.1} parent=0 // loop_pre_header
    _
  $region3: #{factorized_reduce.1} parent=0 // loop_header
    %s11 = sphi 0, %s15
    %p12 = scmp.ge.s32.totalorder %s11, 4
    %s18 = sphi 0, %s30
    %s19 = sphi 0, %s26
    %s20 = sphi 0, %s18
    %s21 = sphi 0, %s19
    %s22 = sphi 0, %s20
    %s23 = sphi 0, %s21
    %s33 = sphi 0, %s35
    %s36 = sphi 0, %s33
    %s37 = sphi 0, %s36
    %s53 = sphi 0, %s37
    %s57 = sphi 0, %s57
    %s59 = sphi 0, %s57
    %s60 = sphi 0, %s59
    %s74 = sphi 0, %s60
    %s78 = sphi 0, %s78
    %s80 = sphi 0, %s78
    %s81 = sphi 0, %s80
    %s95 = sphi 0, %s81
    %s99 = sphi 0, %s99
    %s101 = sphi 0, %s99
    %s102 = sphi 0, %s101
    %s116 = sphi 0, %s102
    %s120 = sphi 0, %s120
    %s122 = sphi 0, %s120
    %s123 = sphi 0, %s122
    %s137 = sphi 0, %s123
    %s145 = sphi 0, %s147
    %s148 = sphi 0, %s145
    %s149 = sphi 0, %s148
    %s165 = sphi 0, %s149
  $region4: #{factorized_reduce.1} parent=0 // loop_header_branch
    %14 = sbr.rel (%p12) target = $region8
  $region5: #{factorized_reduce.1} parent=0 // loop_body
    %s16 = ssub.s32 %s11, 1
    %s17 = ssub.s32 %s11, 2
    %s24 = sadd.s32 1, %s19
    %p25 = scmp.ge.s32.totalorder %s24, 1
    %s26 = scalar_select %p25, 0, %s24
    %s27 = sadd.s32 1, %s18
    %s28 = scalar_select %p25, %s27, %s18
    %p29 = scmp.ge.s32.totalorder %s28, 2
    %s30 = scalar_select %p29, 0, %s28
    %s31 = ssub.s32 %s19, %s26
    %p32 = scmp.eq.s32.totalorder %s31, 0
    %s34 = sadd.s32 %s33, 1
    %s35 = scalar_select %p32, %s33, %s34
    %p38 = pneg %p32
    %p39 = scmp.eq.s32.totalorder %s11, 1
    %p40 = por %p38, %p39
    %p41 = scmp.ne.s32.totalorder %s33, %s36
    %p42 = scmp.eq.s32.totalorder %s11, 0
    %p43 = por %p41, %p42
    %p44 = scmp.ne.s32.totalorder %s33, %s36
    %p45 = scmp.eq.s32.totalorder %s16, 1
    %p46 = por %p44, %p45
    %p47 = scmp.ne.s32.totalorder %s36, %s37
    %p48 = scmp.eq.s32.totalorder %s16, 0
    %p49 = por %p47, %p48
    %p50 = scmp.ne.s32.totalorder %s36, %s37
    %p51 = scmp.eq.s32.totalorder %s17, 1
    %p52 = por %p50, %p51
    %p54 = scmp.ne.s32.totalorder %s37, %s53
    %p55 = scmp.eq.s32.totalorder %s17, 0
    %p56 = por %p54, %p55
    %s58 = sadd.s32 %s57, 1
    %p61 = scmp.eq.s32.totalorder %s11, 1
    %p62 = scmp.ne.s32.totalorder %s57, %s59
    %p63 = scmp.eq.s32.totalorder %s11, 0
    %p64 = por %p62, %p63
    %p65 = scmp.ne.s32.totalorder %s57, %s59
    %p66 = scmp.eq.s32.totalorder %s16, 1
    %p67 = por %p65, %p66
    %p68 = scmp.ne.s32.totalorder %s59, %s60
    %p69 = scmp.eq.s32.totalorder %s16, 0
    %p70 = por %p68, %p69
    %p71 = scmp.ne.s32.totalorder %s59, %s60
    %p72 = scmp.eq.s32.totalorder %s17, 1
    %p73 = por %p71, %p72
    %p75 = scmp.ne.s32.totalorder %s60, %s74
    %p76 = scmp.eq.s32.totalorder %s17, 0
    %p77 = por %p75, %p76
    %s79 = sadd.s32 %s78, 1
    %p82 = scmp.eq.s32.totalorder %s11, 1
    %p83 = scmp.ne.s32.totalorder %s78, %s80
    %p84 = scmp.eq.s32.totalorder %s11, 0
    %p85 = por %p83, %p84
    %p86 = scmp.ne.s32.totalorder %s78, %s80
    %p87 = scmp.eq.s32.totalorder %s16, 1
    %p88 = por %p86, %p87
    %p89 = scmp.ne.s32.totalorder %s80, %s81
    %p90 = scmp.eq.s32.totalorder %s16, 0
    %p91 = por %p89, %p90
    %p92 = scmp.ne.s32.totalorder %s80, %s81
    %p93 = scmp.eq.s32.totalorder %s17, 1
    %p94 = por %p92, %p93
    %p96 = scmp.ne.s32.totalorder %s81, %s95
    %p97 = scmp.eq.s32.totalorder %s17, 0
    %p98 = por %p96, %p97
    %s100 = sadd.s32 %s99, 1
    %p103 = scmp.eq.s32.totalorder %s11, 1
    %p104 = scmp.ne.s32.totalorder %s99, %s101
    %p105 = scmp.eq.s32.totalorder %s11, 0
    %p106 = por %p104, %p105
    %p107 = scmp.ne.s32.totalorder %s99, %s101
    %p108 = scmp.eq.s32.totalorder %s16, 1
    %p109 = por %p107, %p108
    %p110 = scmp.ne.s32.totalorder %s101, %s102
    %p111 = scmp.eq.s32.totalorder %s16, 0
    %p112 = por %p110, %p111
    %p113 = scmp.ne.s32.totalorder %s101, %s102
    %p114 = scmp.eq.s32.totalorder %s17, 1
    %p115 = por %p113, %p114
    %p117 = scmp.ne.s32.totalorder %s102, %s116
    %p118 = scmp.eq.s32.totalorder %s17, 0
    %p119 = por %p117, %p118
    %s121 = sadd.s32 %s120, 1
    %p124 = scmp.eq.s32.totalorder %s11, 1
    %p125 = scmp.ne.s32.totalorder %s120, %s122
    %p126 = scmp.eq.s32.totalorder %s11, 0
    %p127 = por %p125, %p126
    %p128 = scmp.ne.s32.totalorder %s120, %s122
    %p129 = scmp.eq.s32.totalorder %s16, 1
    %p130 = por %p128, %p129
    %p131 = scmp.ne.s32.totalorder %s122, %s123
    %p132 = scmp.eq.s32.totalorder %s16, 0
    %p133 = por %p131, %p132
    %p134 = scmp.ne.s32.totalorder %s122, %s123
    %p135 = scmp.eq.s32.totalorder %s17, 1
    %p136 = por %p134, %p135
    %p138 = scmp.ne.s32.totalorder %s123, %s137
    %p139 = scmp.eq.s32.totalorder %s17, 0
    %p140 = por %p138, %p139
    %s141 = smul.u32 %s18, %s19
    %s142 = smul.u32 %s30, %s26
    %s143 = ssub.s32 %s141, %s142
    %p144 = scmp.eq.s32.totalorder %s143, 0
    %s146 = sadd.s32 %s145, 1
    %s147 = scalar_select %p144, %s145, %s146
    %p150 = pneg %p144
    %p151 = scmp.eq.s32.totalorder %s11, 1
    %p152 = por %p150, %p151
    %p153 = scmp.ne.s32.totalorder %s145, %s148
    %p154 = scmp.eq.s32.totalorder %s11, 0
    %p155 = por %p153, %p154
    %p156 = scmp.ne.s32.totalorder %s145, %s148
    %p157 = scmp.eq.s32.totalorder %s16, 1
    %p158 = por %p156, %p157
    %p159 = scmp.ne.s32.totalorder %s148, %s149
    %p160 = scmp.eq.s32.totalorder %s16, 0
    %p161 = por %p159, %p160
    %p162 = scmp.ne.s32.totalorder %s148, %s149
    %p163 = scmp.eq.s32.totalorder %s17, 1
    %p164 = por %p162, %p163
    %p166 = scmp.ne.s32.totalorder %s149, %s165
    %p167 = scmp.eq.s32.totalorder %s17, 0
    %p168 = por %p166, %p167
    %p169 = scmp.le.s32.totalorder 1, %s11
    %p170 = scmp.lt.s32.totalorder %s11, 3
    %p171 = pnand %p169, %p170
    %p172 = pneg %p171
    // Predicated region
    $region9: #{factorized_reduce.1} parent=5 // pred_check
      _
    $region10: #{factorized_reduce.1} parent=5 // pred_check_branch
      %174 = sbr.rel (%p171) target = $region12
    $region11: #{factorized_reduce.1} parent=5 // pred_region
      %s175 = ssub.s32 %s11, 1
      // Predicated region
      $region13: #{factorized_reduce.1} parent=11 // pred_check
        %p176 = pneg %p49
      $region14: #{factorized_reduce.1} parent=11 // pred_check_branch
        %178 = sbr.rel (%p176) target = $region16
      $region15: #{factorized_reduce.1} parent=11 // pred_region
        %p179 = scmp.lt.s32.totalorder %s21, 0
        %s180 = scalar_select %p179, %s21, 0
        %s181 = smul.addr %s180, 8
        %s182 = scalar_lea.vmem %s0, %s181
      $region16: #{factorized_reduce.1} parent=11 // pred_fallthru
        _
      // Predicated region
      $region17: #{factorized_reduce.1} parent=11 // pred_check
        %p183 = pneg %p70
      $region18: #{factorized_reduce.1} parent=11 // pred_check_branch
        %185 = sbr.rel (%p183) target = $region20
      $region19: #{factorized_reduce.1} parent=11 // pred_region
        _
      $region20: #{factorized_reduce.1} parent=11 // pred_fallthru
        _
      // Predicated region
      $region21: #{factorized_reduce.1} parent=11 // pred_check
        %p186 = pneg %p91
      $region22: #{factorized_reduce.1} parent=11 // pred_check_branch
        %188 = sbr.rel (%p186) target = $region24
      $region23: #{factorized_reduce.1} parent=11 // pred_region
        _
      $region24: #{factorized_reduce.1} parent=11 // pred_fallthru
        _
      // Predicated region
      $region25: #{factorized_reduce.1} parent=11 // pred_check
        %p189 = pneg %p112
      $region26: #{factorized_reduce.1} parent=11 // pred_check_branch
        %191 = sbr.rel (%p189) target = $region28
      $region27: #{factorized_reduce.1} parent=11 // pred_region
        _
      $region28: #{factorized_reduce.1} parent=11 // pred_fallthru
        _
      // Predicated region
      $region29: #{factorized_reduce.1} parent=11 // pred_check
        %p192 = pneg %p133
      $region30: #{factorized_reduce.1} parent=11 // pred_check_branch
        %194 = sbr.rel (%p192) target = $region32
      $region31: #{factorized_reduce.1} parent=11 // pred_region
        _
      $region32: #{factorized_reduce.1} parent=11 // pred_fallthru
        _
    $region12: #{factorized_reduce.1} parent=5 // pred_fallthru
      _
    %p195 = scmp.lt.s32.totalorder %s11, 2
    // Predicated region
    $region33: #{factorized_reduce.1} parent=5 // pred_check
      %p196 = pneg %p195
    $region34: #{factorized_reduce.1} parent=5 // pred_check_branch
      %198 = sbr.rel (%p196) target = $region36
    $region35: #{factorized_reduce.1} parent=5 // pred_region
      _
    $region36: #{factorized_reduce.1} parent=5 // pred_fallthru
      _
    %p199 = scmp.le.s32.totalorder 1, %s11
    %p200 = scmp.lt.s32.totalorder %s11, 3
    %p201 = pnand %p199, %p200
    %p202 = pneg %p201
    // Predicated region
    $region37: #{factorized_reduce.1} parent=5 // pred_check
      _
    $region38: #{factorized_reduce.1} parent=5 // pred_check_branch
      %204 = sbr.rel (%p201) target = $region40
    $region39: #{factorized_reduce.1} parent=5 // pred_region
      %s205 = ssub.s32 %s11, 1
      %p206 = scmp.lt.s32.totalorder %s21, 0
      %s207 = scalar_select %p206, %s21, 0
      %s208 = smul.addr %s207, 8
      %s209 = scalar_lea.vmem %s0, %s208
      %p210 = pneg %p49
      %p211 = pneg %p46
      %p212 = pneg %p70
      %p213 = pneg %p67
      %p214 = pneg %p91
      %p215 = pneg %p88
      %p216 = pneg %p112
      %p217 = pneg %p109
      %p218 = pneg %p133
      %p219 = pneg %p130
      %p220 = pneg %p161
      %p221 = pneg %p158
      %s222 = smul.u32 %s20, %s21
      %p223 = scmp.lt.s32.totalorder %s222, 0
      %s224 = scalar_select %p223, %s222, 0
      %s225 = smul.addr %s224, 8
      %s226 = scalar_lea.vmem %s5, %s225
      %p227 = scmp.lt.s32.totalorder %s21, 0
      %s228 = scalar_select %p227, %s21, 0
      %s229 = smul.addr %s228, 8
      %s230 = scalar_lea.vmem %s0, %s229
      %s231 = smul.u32 %s20, %s21
      %p232 = scmp.lt.s32.totalorder %s231, 0
      %s233 = scalar_select %p232, %s231, 0
      %s234 = smul.addr %s233, 8
      %s235 = scalar_lea.vmem %s5, %s234
      %s236 = smul.u32 %s20, %s21
      %p237 = scmp.eq.s32.totalorder %s20, 0
      %p238 = scmp.eq.s32.totalorder %s21, 0
      %p239 = pnand %p237, %p238
      %p240 = pneg %p239
      // Predicated region
      $region41: #{factorized_reduce.1} parent=39 // pred_check
        _
      $region42: #{factorized_reduce.1} parent=39 // pred_check_branch
        %242 = sbr.rel (%p239) target = $region44
      $region43: #{factorized_reduce.1} parent=39 // pred_region
        %243 = vst [vmem:[#allocation2] sm:$0xff] 0.0
        %244 = vst [vmem:[#allocation3] sm:$0xff] 0.0
      $region44: #{factorized_reduce.1} parent=39 // pred_fallthru
        _
      // Predicated region
      $region45: #{factorized_reduce.1} parent=39 // pred_check
        %p245 = pneg %p237
      $region46: #{factorized_reduce.1} parent=39 // pred_check_branch
        %247 = sbr.rel (%p245) target = $region48
      $region47: #{factorized_reduce.1} parent=39 // pred_region
        %v248 = vld [vmem:[%s230] sm:$0xff]
        %v249 = vmax.f32 %v248, 0.0
        %v250 = vld [vmem:[%s1] sm:$0xff]
        %v251 = vld [vmem:[%s1 + $0x8] sm:$0xff]
        %v252 = vld [vmem:[%s1 + $0x10] sm:$0xff]
        %v253 = vld [vmem:[%s1 + $0x18] sm:$0xff]
        %v254 = vld [vmem:[%s1 + $0x20] sm:$0xff]
        %v255 = vld [vmem:[%s1 + $0x28] sm:$0xff]
        %v256 = vld [vmem:[%s1 + $0x30] sm:$0xff]
        %v257 = vld [vmem:[%s1 + $0x38] sm:$0xff]
        %v258 = vld [vmem:[%s1 + $0x40] sm:$0xff]
        %v259 = vld [vmem:[%s1 + $0x48] sm:$0xff]
        %v260 = vld [vmem:[%s1 + $0x50] sm:$0xff]
        %v261 = vld [vmem:[%s1 + $0x58] sm:$0xff]
        %v262 = vld [vmem:[%s1 + $0x60] sm:$0xff]
        %v263 = vld [vmem:[%s1 + $0x68] sm:$0xff]
        %v264 = vld [vmem:[%s1 + $0x70] sm:$0xff]
        %v265 = vld [vmem:[%s1 + $0x78] sm:$0xff]
        %266 = vmatprep.subr.mxu0 0.0
        %267 = vmatpush1.msra.mxu0 %v250
        %268 = vmatprep.subr.mxu0 0.0
        %269 = vmatpush1.msra.mxu0 %v251
        %270 = vmatprep.subr.mxu0 0.0
        %271 = vmatpush1.msra.mxu0 %v252
        %272 = vmatprep.subr.mxu0 0.0
        %273 = vmatpush1.msra.mxu0 %v253
        %274 = vmatprep.subr.mxu0 0.0
        %275 = vmatpush1.msra.mxu0 %v254
        %276 = vmatprep.subr.mxu0 0.0
        %277 = vmatpush1.msra.mxu0 %v255
        %278 = vmatprep.subr.mxu0 0.0
        %279 = vmatpush1.msra.mxu0 %v256
        %280 = vmatprep.subr.mxu0 0.0
        %281 = vmatpush1.msra.mxu0 %v257
        %282 = vmatprep.subr.mxu0 0.0
        %283 = vmatpush1.msra.mxu0 %v258
        %284 = vmatprep.subr.mxu0 0.0
        %285 = vmatpush1.msra.mxu0 %v259
        %286 = vmatprep.subr.mxu0 0.0
        %287 = vmatpush1.msra.mxu0 %v260
        %288 = vmatprep.subr.mxu0 0.0
        %289 = vmatpush1.msra.mxu0 %v261
        %290 = vmatprep.subr.mxu0 0.0
        %291 = vmatpush1.msra.mxu0 %v262
        %292 = vmatprep.subr.mxu0 0.0
        %293 = vmatpush1.msra.mxu0 %v263
        %294 = vmatprep.subr.mxu0 0.0
        %295 = vmatpush1.msra.mxu0 %v264
        %296 = vmatprep.subr.mxu0 0.0
        %297 = vmatpush1.msra.mxu0 %v265
        %298 = vmatprep.subr.mxu0 0.0
        %299 = vmatpush1.msra.mxu0 0.0
        %300 = vmatprep.subr.mxu0 0.0
        %301 = vmatpush1.msra.mxu0 0.0
        %302 = vmatprep.subr.mxu0 0.0
        %303 = vmatpush1.msra.mxu0 0.0
        %304 = vmatprep.subr.mxu0 0.0
        %305 = vmatpush1.msra.mxu0 0.0
        %306 = vmatprep.subr.mxu0 0.0
        %307 = vmatpush1.msra.mxu0 0.0
        %308 = vmatprep.subr.mxu0 0.0
        %309 = vmatpush1.msra.mxu0 0.0
        %310 = vmatprep.subr.mxu0 0.0
        %311 = vmatpush1.msra.mxu0 0.0
        %312 = vmatprep.subr.mxu0 0.0
        %313 = vmatpush1.msra.mxu0 0.0
        %314 = vmatprep.subr.mxu0 0.0
        %315 = vmatpush1.msra.mxu0 0.0
        %316 = vmatprep.subr.mxu0 0.0
        %317 = vmatpush1.msra.mxu0 0.0
        %318 = vmatprep.subr.mxu0 0.0
        %319 = vmatpush1.msra.mxu0 0.0
        %320 = vmatprep.subr.mxu0 0.0
        %321 = vmatpush1.msra.mxu0 0.0
        %322 = vmatprep.subr.mxu0 0.0
        %323 = vmatpush1.msra.mxu0 0.0
        %324 = vmatprep.subr.mxu0 0.0
        %325 = vmatpush1.msra.mxu0 0.0
        %326 = vmatprep.subr.mxu0 0.0
        %327 = vmatpush1.msra.mxu0 0.0
        %328 = vmatprep.subr.mxu0 0.0
        %329 = vmatpush1.msra.mxu0 0.0
        %330 = vmatprep.mubr.f32.mxu0 0.0
        %331 = vmatmul.mubr.f32.gmra.mrb[0].mxu0 %v249
        %v332 = vpop.f32.mrb[0].mxu0
        %v333 = vadd.f32 0.0, %v332
        %v334 = vpop.f32.mrb[0].mxu0
        %335 = vdwg.mxu0
        %v336 = vld [vmem:[#allocation2] sm:$0xff]
        %v337 = vadd.f32 %v333, 0.0
        %v338 = vadd.f32 %v336, %v337
        %339 = vst [vmem:[#allocation2] sm:$0xff] %v338
        %v340 = vld [vmem:[#allocation3] sm:$0xff]
        %v341 = vmul.f32 %v333, %v333
        %v342 = vadd.f32 %v341, 0.0
        %v343 = vadd.f32 %v340, %v342
        %344 = vst [vmem:[#allocation3] sm:$0xff] %v343
      $region48: #{factorized_reduce.1} parent=39 // pred_fallthru
        _
      %p345 = scmp.eq.s32.totalorder %s20, 1
      %p346 = pnand %p345, %p238
      %p347 = pneg %p346
      // Predicated region
      $region49: #{factorized_reduce.1} parent=39 // pred_check
        _
      $region50: #{factorized_reduce.1} parent=39 // pred_check_branch
        %349 = sbr.rel (%p346) target = $region52
      $region51: #{factorized_reduce.1} parent=39 // pred_region
        %v350 = vld [vmem:[#allocation2] sm:$0xff]
        %v351 = vld [vmem:[%s2] sm:$0xff]
        %v352 = vld [vmem:[%s2 + $0x8] sm:$0xff]
        %v353 = vld [vmem:[%s2 + $0x10] sm:$0xff]
        %v354 = vld [vmem:[%s2 + $0x18] sm:$0xff]
        %v355 = vld [vmem:[%s2 + $0x20] sm:$0xff]
        %v356 = vld [vmem:[%s2 + $0x28] sm:$0xff]
        %v357 = vld [vmem:[%s2 + $0x30] sm:$0xff]
        %v358 = vld [vmem:[%s2 + $0x38] sm:$0xff]
        %v359 = vld [vmem:[%s2 + $0x40] sm:$0xff]
        %v360 = vld [vmem:[%s2 + $0x48] sm:$0xff]
        %v361 = vld [vmem:[%s2 + $0x50] sm:$0xff]
        %v362 = vld [vmem:[%s2 + $0x58] sm:$0xff]
        %v363 = vld [vmem:[%s2 + $0x60] sm:$0xff]
        %v364 = vld [vmem:[%s2 + $0x68] sm:$0xff]
        %v365 = vld [vmem:[%s2 + $0x70] sm:$0xff]
        %v366 = vld [vmem:[%s2 + $0x78] sm:$0xff]
        %367 = vmatprep.subr.mxu0 0.0
        %368 = vmatpush1.msra.mxu0 %v351
        %369 = vmatprep.subr.mxu0 0.0
        %370 = vmatpush1.msra.mxu0 %v352
        %371 = vmatprep.subr.mxu0 0.0
        %372 = vmatpush1.msra.mxu0 %v353
        %373 = vmatprep.subr.mxu0 0.0
        %374 = vmatpush1.msra.mxu0 %v354
        %375 = vmatprep.subr.mxu0 0.0
        %376 = vmatpush1.msra.mxu0 %v355
        %377 = vmatprep.subr.mxu0 0.0
        %378 = vmatpush1.msra.mxu0 %v356
        %379 = vmatprep.subr.mxu0 0.0
        %380 = vmatpush1.msra.mxu0 %v357
        %381 = vmatprep.subr.mxu0 0.0
        %382 = vmatpush1.msra.mxu0 %v358
        %383 = vmatprep.subr.mxu0 0.0
        %384 = vmatpush1.msra.mxu0 %v359
        %385 = vmatprep.subr.mxu0 0.0
        %386 = vmatpush1.msra.mxu0 %v360
        %387 = vmatprep.subr.mxu0 0.0
        %388 = vmatpush1.msra.mxu0 %v361
        %389 = vmatprep.subr.mxu0 0.0
        %390 = vmatpush1.msra.mxu0 %v362
        %391 = vmatprep.subr.mxu0 0.0
        %392 = vmatpush1.msra.mxu0 %v363
        %393 = vmatprep.subr.mxu0 0.0
        %394 = vmatpush1.msra.mxu0 %v364
        %395 = vmatprep.subr.mxu0 0.0
        %396 = vmatpush1.msra.mxu0 %v365
        %397 = vmatprep.subr.mxu0 0.0
        %398 = vmatpush1.msra.mxu0 %v366
        %399 = vmatprep.subr.mxu0 0.0
        %400 = vmatpush1.msra.mxu0 0.0
        %401 = vmatprep.subr.mxu0 0.0
        %402 = vmatpush1.msra.mxu0 0.0
        %403 = vmatprep.subr.mxu0 0.0
        %404 = vmatpush1.msra.mxu0 0.0
        %405 = vmatprep.subr.mxu0 0.0
        %406 = vmatpush1.msra.mxu0 0.0
        %407 = vmatprep.subr.mxu0 0.0
        %408 = vmatpush1.msra.mxu0 0.0
        %409 = vmatprep.subr.mxu0 0.0
        %410 = vmatpush1.msra.mxu0 0.0
        %411 = vmatprep.subr.mxu0 0.0
        %412 = vmatpush1.msra.mxu0 0.0
        %413 = vmatprep.subr.mxu0 0.0
        %414 = vmatpush1.msra.mxu0 0.0
        %415 = vmatprep.subr.mxu0 0.0
        %416 = vmatpush1.msra.mxu0 0.0
        %417 = vmatprep.subr.mxu0 0.0
        %418 = vmatpush1.msra.mxu0 0.0
        %419 = vmatprep.subr.mxu0 0.0
        %420 = vmatpush1.msra.mxu0 0.0
        %421 = vmatprep.subr.mxu0 0.0
        %422 = vmatpush1.msra.mxu0 0.0
        %423 = vmatprep.subr.mxu0 0.0
        %424 = vmatpush1.msra.mxu0 0.0
        %425 = vmatprep.subr.mxu0 0.0
        %426 = vmatpush1.msra.mxu0 0.0
        %427 = vmatprep.subr.mxu0 0.0
        %428 = vmatpush1.msra.mxu0 0.0
        %429 = vmatprep.subr.mxu0 0.0
        %430 = vmatpush1.msra.mxu0 0.0
        %431 = vmatprep.mubr.f32.mxu0 0.0
        %432 = vmatmul.mubr.f32.gmra.mrb[0].mxu0 %v350
        %v433 = vpop.f32.mrb[0].mxu0
        %v434 = vadd.f32 0.0, %v433
        %v435 = vpop.f32.mrb[0].mxu0
        %436 = vdwg.mxu0
        %v437 = vld [vmem:[#allocation3] sm:$0xff]
        %438 = vmatprep.subr.mxu0 0.0
        %439 = vmatpush1.msra.mxu0 %v351
        %440 = vmatprep.subr.mxu0 0.0
        %441 = vmatpush1.msra.mxu0 %v352
        %442 = vmatprep.subr.mxu0 0.0
        %443 = vmatpush1.msra.mxu0 %v353
        %444 = vmatprep.subr.mxu0 0.0
        %445 = vmatpush1.msra.mxu0 %v354
        %446 = vmatprep.subr.mxu0 0.0
        %447 = vmatpush1.msra.mxu0 %v355
        %448 = vmatprep.subr.mxu0 0.0
        %449 = vmatpush1.msra.mxu0 %v356
        %450 = vmatprep.subr.mxu0 0.0
        %451 = vmatpush1.msra.mxu0 %v357
        %452 = vmatprep.subr.mxu0 0.0
        %453 = vmatpush1.msra.mxu0 %v358
        %454 = vmatprep.subr.mxu0 0.0
        %455 = vmatpush1.msra.mxu0 %v359
        %456 = vmatprep.subr.mxu0 0.0
        %457 = vmatpush1.msra.mxu0 %v360
        %458 = vmatprep.subr.mxu0 0.0
        %459 = vmatpush1.msra.mxu0 %v361
        %460 = vmatprep.subr.mxu0 0.0
        %461 = vmatpush1.msra.mxu0 %v362
        %462 = vmatprep.subr.mxu0 0.0
        %463 = vmatpush1.msra.mxu0 %v363
        %464 = vmatprep.subr.mxu0 0.0
        %465 = vmatpush1.msra.mxu0 %v364
        %466 = vmatprep.subr.mxu0 0.0
        %467 = vmatpush1.msra.mxu0 %v365
        %468 = vmatprep.subr.mxu0 0.0
        %469 = vmatpush1.msra.mxu0 %v366
        %470 = vmatprep.subr.mxu0 0.0
        %471 = vmatpush1.msra.mxu0 0.0
        %472 = vmatprep.subr.mxu0 0.0
        %473 = vmatpush1.msra.mxu0 0.0
        %474 = vmatprep.subr.mxu0 0.0
        %475 = vmatpush1.msra.mxu0 0.0
        %476 = vmatprep.subr.mxu0 0.0
        %477 = vmatpush1.msra.mxu0 0.0
        %478 = vmatprep.subr.mxu0 0.0
        %479 = vmatpush1.msra.mxu0 0.0
        %480 = vmatprep.subr.mxu0 0.0
        %481 = vmatpush1.msra.mxu0 0.0
        %482 = vmatprep.subr.mxu0 0.0
        %483 = vmatpush1.msra.mxu0 0.0
        %484 = vmatprep.subr.mxu0 0.0
        %485 = vmatpush1.msra.mxu0 0.0
        %486 = vmatprep.subr.mxu0 0.0
        %487 = vmatpush1.msra.mxu0 0.0
        %488 = vmatprep.subr.mxu0 0.0
        %489 = vmatpush1.msra.mxu0 0.0
        %490 = vmatprep.subr.mxu0 0.0
        %491 = vmatpush1.msra.mxu0 0.0
        %492 = vmatprep.subr.mxu0 0.0
        %493 = vmatpush1.msra.mxu0 0.0
        %494 = vmatprep.subr.mxu0 0.0
        %495 = vmatpush1.msra.mxu0 0.0
        %496 = vmatprep.subr.mxu0 0.0
        %497 = vmatpush1.msra.mxu0 0.0
        %498 = vmatprep.subr.mxu0 0.0
        %499 = vmatpush1.msra.mxu0 0.0
        %500 = vmatprep.subr.mxu0 0.0
        %501 = vmatpush1.msra.mxu0 0.0
        %502 = vmatprep.mubr.f32.mxu0 0.0
        %503 = vmatmul.mubr.f32.gmra.mrb[0].mxu0 %v437
        %v504 = vpop.f32.mrb[0].mxu0
        %v505 = vadd.f32 0.0, %v504
        %v506 = vpop.f32.mrb[0].mxu0
        %507 = vdwg.mxu0
        %v508 = vrot.slane %v434, 4
        %v509 = vadd.f32 %v434, %v508
        %v510 = vrot.slane %v509, 2
        %v511 = vadd.f32 %v509, %v510
        %v512 = vrot.slane %v511, 1
        %v513 = vadd.f32 %v511, %v512
        %v514 = vrot.slane %v505, 4
        %v515 = vadd.f32 %v505, %v514
        %v516 = vrot.slane %v515, 2
        %v517 = vadd.f32 %v515, %v516
        %v518 = vrot.slane %v517, 1
        %v519 = vadd.f32 %v517, %v518
        %v520 = vmul.f32 %v513, 0.0078125
        %v521 = vmul.f32 %v519, 0.0078125
        %v522 = vmul.f32 %v520, %v520
        %v523 = vsub.f32 %v521, %v522
        %v524 = vmax.f32 %v523, 0.0
        %v525 = vadd.f32 %v524, 1e-05
        %v526 = vrsqrt.pop %v525
        %v527 = vld [vmem:[%s3] sm:$0x1]
        %v528 = vmul.f32 %v527, %v526
        %529 = vst [vmem:[#allocation4] sm:$0x1] %v528
        %v530 = vld [vmem:[%s4] sm:$0x1]
        %v531 = vmul.f32 %v520, %v528
        %v532 = vsub.f32 %v530, %v531
        %533 = vst [vmem:[#allocation5] sm:$0x1] %v532
      $region52: #{factorized_reduce.1} parent=39 // pred_fallthru
        _
      // Predicated region
      $region53: #{factorized_reduce.1} parent=39 // pred_check
        %p534 = pneg %p345
      $region54: #{factorized_reduce.1} parent=39 // pred_check_branch
        %536 = sbr.rel (%p534) target = $region56
      $region55: #{factorized_reduce.1} parent=39 // pred_region
        %v537 = vld [vmem:[%s230] sm:$0xff]
        %v538 = vmax.f32 %v537, 0.0
        %v539 = vld [vmem:[%s1] sm:$0xff]
        %v540 = vld [vmem:[%s1 + $0x8] sm:$0xff]
        %v541 = vld [vmem:[%s1 + $0x10] sm:$0xff]
        %v542 = vld [vmem:[%s1 + $0x18] sm:$0xff]
        %v543 = vld [vmem:[%s1 + $0x20] sm:$0xff]
        %v544 = vld [vmem:[%s1 + $0x28] sm:$0xff]
        %v545 = vld [vmem:[%s1 + $0x30] sm:$0xff]
        %v546 = vld [vmem:[%s1 + $0x38] sm:$0xff]
        %v547 = vld [vmem:[%s1 + $0x40] sm:$0xff]
        %v548 = vld [vmem:[%s1 + $0x48] sm:$0xff]
        %v549 = vld [vmem:[%s1 + $0x50] sm:$0xff]
        %v550 = vld [vmem:[%s1 + $0x58] sm:$0xff]
        %v551 = vld [vmem:[%s1 + $0x60] sm:$0xff]
        %v552 = vld [vmem:[%s1 + $0x68] sm:$0xff]
        %v553 = vld [vmem:[%s1 + $0x70] sm:$0xff]
        %v554 = vld [vmem:[%s1 + $0x78] sm:$0xff]
        %555 = vmatprep.subr.mxu0 0.0
        %556 = vmatpush1.msra.mxu0 %v539
        %557 = vmatprep.subr.mxu0 0.0
        %558 = vmatpush1.msra.mxu0 %v540
        %559 = vmatprep.subr.mxu0 0.0
        %560 = vmatpush1.msra.mxu0 %v541
        %561 = vmatprep.subr.mxu0 0.0
        %562 = vmatpush1.msra.mxu0 %v542
        %563 = vmatprep.subr.mxu0 0.0
        %564 = vmatpush1.msra.mxu0 %v543
        %565 = vmatprep.subr.mxu0 0.0
        %566 = vmatpush1.msra.mxu0 %v544
        %567 = vmatprep.subr.mxu0 0.0
        %568 = vmatpush1.msra.mxu0 %v545
        %569 = vmatprep.subr.mxu0 0.0
        %570 = vmatpush1.msra.mxu0 %v546
        %571 = vmatprep.subr.mxu0 0.0
        %572 = vmatpush1.msra.mxu0 %v547
        %573 = vmatprep.subr.mxu0 0.0
        %574 = vmatpush1.msra.mxu0 %v548
        %575 = vmatprep.subr.mxu0 0.0
        %576 = vmatpush1.msra.mxu0 %v549
        %577 = vmatprep.subr.mxu0 0.0
        %578 = vmatpush1.msra.mxu0 %v550
        %579 = vmatprep.subr.mxu0 0.0
        %580 = vmatpush1.msra.mxu0 %v551
        %581 = vmatprep.subr.mxu0 0.0
        %582 = vmatpush1.msra.mxu0 %v552
        %583 = vmatprep.subr.mxu0 0.0
        %584 = vmatpush1.msra.mxu0 %v553
        %585 = vmatprep.subr.mxu0 0.0
        %586 = vmatpush1.msra.mxu0 %v554
        %587 = vmatprep.subr.mxu0 0.0
        %588 = vmatpush1.msra.mxu0 0.0
        %589 = vmatprep.subr.mxu0 0.0
        %590 = vmatpush1.msra.mxu0 0.0
        %591 = vmatprep.subr.mxu0 0.0
        %592 = vmatpush1.msra.mxu0 0.0
        %593 = vmatprep.subr.mxu0 0.0
        %594 = vmatpush1.msra.mxu0 0.0
        %595 = vmatprep.subr.mxu0 0.0
        %596 = vmatpush1.msra.mxu0 0.0
        %597 = vmatprep.subr.mxu0 0.0
        %598 = vmatpush1.msra.mxu0 0.0
        %599 = vmatprep.subr.mxu0 0.0
        %600 = vmatpush1.msra.mxu0 0.0
        %601 = vmatprep.subr.mxu0 0.0
        %602 = vmatpush1.msra.mxu0 0.0
        %603 = vmatprep.subr.mxu0 0.0
        %604 = vmatpush1.msra.mxu0 0.0
        %605 = vmatprep.subr.mxu0 0.0
        %606 = vmatpush1.msra.mxu0 0.0
        %607 = vmatprep.subr.mxu0 0.0
        %608 = vmatpush1.msra.mxu0 0.0
        %609 = vmatprep.subr.mxu0 0.0
        %610 = vmatpush1.msra.mxu0 0.0
        %611 = vmatprep.subr.mxu0 0.0
        %612 = vmatpush1.msra.mxu0 0.0
        %613 = vmatprep.subr.mxu0 0.0
        %614 = vmatpush1.msra.mxu0 0.0
        %615 = vmatprep.subr.mxu0 0.0
        %616 = vmatpush1.msra.mxu0 0.0
        %617 = vmatprep.subr.mxu0 0.0
        %618 = vmatpush1.msra.mxu0 0.0
        %619 = vmatprep.mubr.f32.mxu0 0.0
        %620 = vmatmul.mubr.f32.gmra.mrb[0].mxu0 %v538
        %v621 = vpop.f32.mrb[0].mxu0
        %v622 = vadd.f32 0.0, %v621
        %v623 = vpop.f32.mrb[0].mxu0
        %624 = vdwg.mxu0
        %v625 = vld [vmem:[#allocation4] sm:$0x1]
        %v627 = vlaneseq
        %v628 = vshrl.u32 %v627, 7
        %v629 = vsub.s32 0, %v628
        %v630 = vrot.slane %v625, %v629
        %v632 = vmul.f32 %v622, %v630
        %v633 = vld [vmem:[#allocation5] sm:$0x1]
        %v635 = vlaneseq
        %v636 = vshrl.u32 %v635, 7
        %v637 = vsub.s32 0, %v636
        %v638 = vrot.slane %v633, %v637
        %v640 = vadd.f32 %v632, %v638
        %641 = vst [vmem:[%s235] sm:$0xff] %v640
      $region56: #{factorized_reduce.1} parent=39 // pred_fallthru
        _
      %s642 = smul.u32 %s20, %s21
      %p643 = scmp.lt.s32.totalorder %s642, 0
      %s644 = scalar_select %p643, %s642, 0
      %s645 = smul.addr %s644, 8
      %s646 = scalar_lea.vmem %s5, %s645
      // Predicated region
      $region57: #{factorized_reduce.1} parent=39 // pred_check
        %p647 = pneg %p158
      $region58: #{factorized_reduce.1} parent=39 // pred_check_branch
        %649 = sbr.rel (%p647) target = $region60
      $region59: #{factorized_reduce.1} parent=39 // pred_region
        %s650 = smul.u32 %s20, %s21
      $region60: #{factorized_reduce.1} parent=39 // pred_fallthru
        _
    $region40: #{factorized_reduce.1} parent=5 // pred_fallthru
      _
    %p651 = scmp.le.s32.totalorder 2, %s11
    // Predicated region
    $region61: #{factorized_reduce.1} parent=5 // pred_check
      %p652 = pneg %p651
    $region62: #{factorized_reduce.1} parent=5 // pred_check_branch
      %654 = sbr.rel (%p652) target = $region64
    $region63: #{factorized_reduce.1} parent=5 // pred_region
      %s655 = ssub.s32 %s11, 2
      // Predicated region
      $region65: #{factorized_reduce.1} parent=63 // pred_check
        %p656 = pneg %p164
      $region66: #{factorized_reduce.1} parent=63 // pred_check_branch
        %658 = sbr.rel (%p656) target = $region68
      $region67: #{factorized_reduce.1} parent=63 // pred_region
        %s659 = smul.u32 %s22, %s23
        %p660 = scmp.lt.s32.totalorder %s659, 0
        %s661 = scalar_select %p660, %s659, 0
        %s662 = smul.addr %s661, 8
        %s663 = scalar_lea.vmem %s5, %s662
      $region68: #{factorized_reduce.1} parent=63 // pred_fallthru
        _
    $region64: #{factorized_reduce.1} parent=5 // pred_fallthru
      _
  $region6: #{factorized_reduce.1} parent=0 // loop_footer
    %s15 = sadd.s32 1, %s11
  $region7: #{factorized_reduce.1} parent=0 // loop_footer_branch
    %10 = sbr.rel target = $region3
  $region8: #{factorized_reduce.1} parent=0 // loop_exit
    _

</llo_original>
